<compile_context>
chip_gen: v7x
topology: tpu7x:2x2x1
jax: 0.10.0
libtpu: 0.0.40
codegen_flags: <defaults>
</compile_context>

<pallas_src>
import jax
import jax.numpy as jnp
from jax import lax
from jax.experimental import pallas as pl
from jax.experimental.pallas import tpu as pltpu


def _make_kernel(eps, inv_osf, n1, n2, L, use_shortcut):
    """Build the fused resnet-block kernel (static config baked in via closure)."""
    f32 = jnp.float32

    def kernel(x_ref, lane2b_ref, b2lane_ref, proj_ref,
               g1_ref, be1_ref, a1_ref, a1t_ref, w1_ref, b1_ref,
               g2_ref, be2_ref, a2_ref, a2t_ref, w2_ref, b2_ref,
               *rest):
        out_ref = rest[-1]
        x = x_ref[...]                 # (Cin, Bt*L)  batch folded into lanes
        lane2b = lane2b_ref[...]       # (Bt*L, B)    one-hot lane -> batch (segment sum)
        b2lane = b2lane_ref[...]       # (B, Bt*L)    one-hot batch -> lane (broadcast)
        btl = x.shape[1]

        def group_norm(v, A, AT, gamma, beta, n):
            # Per-batch lane reduction first (contraction over lanes, N = B tiny),
            # then the tiny (G,C) group aggregation -- no (G,C)@(C,L) matmuls.
            s1 = jnp.dot(v, lane2b, preferred_element_type=f32)          # (C, B)
            s2 = jnp.dot(v * v, lane2b, preferred_element_type=f32)      # (C, B)
            gsum1 = jnp.dot(A, s1, preferred_element_type=f32)           # (G, B)
            gsum2 = jnp.dot(A, s2, preferred_element_type=f32)           # (G, B)
            mean_g = gsum1 * (1.0 / n)
            var_g = jnp.maximum(gsum2 * (1.0 / n) - mean_g * mean_g, 0.0)  # clamp >= 0
            rstd_g = lax.rsqrt(var_g + eps)
            # broadcast back per (channel, batch) -> lanes
            mean_c = jnp.dot(jnp.dot(AT, mean_g, preferred_element_type=f32), b2lane,
                             preferred_element_type=f32)                 # (C, Bt*L)
            rstd_c = jnp.dot(jnp.dot(AT, rstd_g, preferred_element_type=f32), b2lane,
                             preferred_element_type=f32)                 # (C, Bt*L)
            return (v - mean_c) * rstd_c * gamma + beta

        def conv3(v, w_flat, b_col):
            # k=3 / pad=1 Conv1d as a single fused MXU matmul:
            #   [v[l-1]; v[l]; v[l+1]]  (3C, Bt*L)  @  (Cout, 3C)^T-packed weights.
            # Shifts via pltpu.roll (XLU); per-segment zero padding via iota mask (VPU).
            C = v.shape[0]
            pos = lax.broadcasted_iota(jnp.int32, (C, btl), 1) % L
            v_prev = jnp.where(pos == 0, 0.0, pltpu.roll(v, shift=1, axis=1))
            v_next = jnp.where(pos == L - 1, 0.0, pltpu.roll(v, shift=btl - 1, axis=1))
            stacked = jnp.concatenate([v_prev, v, v_next], axis=0)        # (3C, Bt*L)
            return jnp.dot(w_flat, stacked, preferred_element_type=f32) + b_col

        # norm1 + swish
        h = group_norm(x, a1_ref[...], a1t_ref[...], g1_ref[...], be1_ref[...], n1)
        h = jax.nn.silu(h)
        # conv1
        h = conv3(h, w1_ref[...], b1_ref[...])
        # time-embedding bias (projection hoisted to the wrapper): (Cout,B)@(B,Bt*L)
        h = h + jnp.dot(proj_ref[...], b2lane, preferred_element_type=f32)
        # norm2 + swish (dropout p=0.0 -> identity)
        h = group_norm(h, a2_ref[...], a2t_ref[...], g2_ref[...], be2_ref[...], n2)
        h = jax.nn.silu(h)
        # conv2
        h = conv3(h, w2_ref[...], b2_ref[...])
        # shortcut (1x1 conv on the untouched input, or identity), residual, scale
        if use_shortcut:
            ws_ref, bs_ref = rest[0], rest[1]
            sc = jnp.dot(ws_ref[...], x, preferred_element_type=f32) + bs_ref[...]
        else:
            sc = x
        out_ref[...] = ((sc + h) * inv_osf).astype(out_ref.dtype)

    return kernel


def resnet_block_1d(x, temb, params, *, groups, eps=1e-6, output_scale_factor=1.0,
                    batch_tile=None):
    B, Cin, L = x.shape
    Cout = params["conv1_w"].shape[0]
    G = groups
    f32 = jnp.float32
    use_shortcut = "short_w" in params
    if not use_shortcut:
        assert Cin == Cout, "identity shortcut requires Cin == Cout"

    # ---- choose how many batch elements to fold into the lane axis per grid step ----
    if batch_tile is None:
        bt = B
        for cand in range(1, B + 1):
            if B % cand == 0 and (cand * L) % 128 == 0:
                bt = cand
                break
    else:
        bt = batch_tile
    assert B % bt == 0 and (bt == B or (bt * L) % 128 == 0)
    n_steps = B // bt
    btl = bt * L

    # ---- wrapper-side glue (plain XLA): projections, layout plumbing, packed weights ----
    # time-embedding projection as ONE dense batched matmul (hoisted out of the kernel)
    proj = jax.nn.silu(temb.astype(f32)) @ params["time_w"].astype(f32).T \
        + params["time_b"].astype(f32)                                  # (B, Cout)
    projB = proj.T                                                      # (Cout, B)

    # channels-major, batch folded into lanes: x_t[c, b*L + l] = x[b, c, l]
    x_t = jnp.transpose(x, (1, 0, 2)).reshape(Cin, B * L).astype(f32)

    # fused 3-tap conv weights: (Cout, C, 3) -> (Cout, 3*C), column block k = tap k
    w1f = jnp.transpose(params["conv1_w"], (0, 2, 1)).reshape(Cout, 3 * Cin).astype(f32)
    w2f = jnp.transpose(params["conv2_w"], (0, 2, 1)).reshape(Cout, 3 * Cout).astype(f32)
    b1 = params["conv1_b"].reshape(Cout, 1).astype(f32)
    b2 = params["conv2_b"].reshape(Cout, 1).astype(f32)
    g1 = params["norm1_w"].reshape(Cin, 1).astype(f32)
    be1 = params["norm1_b"].reshape(Cin, 1).astype(f32)
    g2 = params["norm2_w"].reshape(Cout, 1).astype(f32)
    be2 = params["norm2_b"].reshape(Cout, 1).astype(f32)

    # one-hot group-membership matrices (tiny group aggregation on the MXU)
    a1 = (jnp.arange(Cin)[None, :] // (Cin // G) == jnp.arange(G)[:, None]).astype(f32)
    a2 = (jnp.arange(Cout)[None, :] // (Cout // G) == jnp.arange(G)[:, None]).astype(f32)
    a1t = jnp.asarray(a1.T)
    a2t = jnp.asarray(a2.T)

    # lane <-> batch one-hot segment matrices (batch folded into the lane axis)
    lane_batch = jnp.arange(B * L) // L
    b2lane = (lane_batch[None, :] == jnp.arange(B)[:, None]).astype(f32)   # (B, B*L)
    lane2b = jnp.asarray(b2lane.T)                                         # (B*L, B)

    n1 = float((Cin // G) * L)
    n2 = float((Cout // G) * L)

    kernel = _make_kernel(float(eps), float(1.0 / output_scale_factor),
                          n1, n2, int(L), use_shortcut)

    def const_spec(arr):
        nd = arr.ndim
        return pl.BlockSpec(tuple(arr.shape), lambda i, _nd=nd: (0,) * _nd)

    blocked_arrays = [x_t, lane2b, b2lane]
    blocked_specs = [
        pl.BlockSpec((Cin, btl), lambda i: (0, i)),
        pl.BlockSpec((btl, B), lambda i: (i, 0)),
        pl.BlockSpec((B, btl), lambda i: (0, i)),
    ]
    const_arrays = [projB, g1, be1, a1, a1t, w1f, b1, g2, be2, a2, a2t, w2f, b2]
    if use_shortcut:
        ws = params["short_w"].astype(f32)
        bs = params["short_b"].reshape(Cout, 1).astype(f32)
        const_arrays += [ws, bs]
    in_specs = blocked_specs + [const_spec(a) for a in const_arrays]

    # NOTE: weights could be cast to bf16 for the MXU on v6e/v7x; kept f32 here so the
    #       numerical check against the f32 reference stays tight.
    out_flat = pl.pallas_call(
        kernel,
        out_shape=jax.ShapeDtypeStruct((Cout, B * L), x.dtype),
        grid_spec=pltpu.PrefetchScalarGridSpec(
            num_scalar_prefetch=0,
            grid=(n_steps,),
            in_specs=in_specs,
            out_specs=pl.BlockSpec((Cout, btl), lambda i: (0, i)),
        ),
        compiler_params=pltpu.CompilerParams(dimension_semantics=("parallel",)),
    )(*blocked_arrays, *const_arrays)

    # lane-dense (Cout, B*L) slab -> (B, Cout, L)  (layout plumbing only)
    return jnp.transpose(out_flat.reshape(Cout, B, L), (1, 0, 2))


# ----------------- pure-JAX reference (for correctness check) -----------------
def reference_forward(x, temb, params, *, groups, eps=1e-6, output_scale_factor=1.0):
    def gn(v, gamma, beta):
        B, C, L = v.shape
        vr = v.reshape(B, groups, (C // groups) * L)
        m = vr.mean(axis=2, keepdims=True)
        var = ((vr - m) ** 2).mean(axis=2, keepdims=True)
        vn = (vr - m) / jnp.sqrt(var + eps)
        return vn.reshape(B, C, L) * gamma[None, :, None] + beta[None, :, None]

    def conv1d(v, w, b):
        y = lax.conv_general_dilated(v, w, window_strides=(1,), padding=[(1, 1)],
                                     dimension_numbers=("NCH", "OIH", "NCH"))
        return y + b[None, :, None]

    h = jax.nn.silu(gn(x, params["norm1_w"], params["norm1_b"]))
    h = conv1d(h, params["conv1_w"], params["conv1_b"])
    t = jax.nn.silu(temb) @ params["time_w"].T + params["time_b"]
    h = h + t[:, :, None]
    h = jax.nn.silu(gn(h, params["norm2_w"], params["norm2_b"]))
    h = conv1d(h, params["conv2_w"], params["conv2_b"])
    if "short_w" in params:
        sc = jnp.einsum("oi,bil->bol", params["short_w"], x) + params["short_b"][None, :, None]
    else:
        sc = x
    return (sc + h) / output_scale_factor


if __name__ == "__main__":
    B, Cin, Cout, L, T, G = 2, 16, 32, 64, 64, 4

    key = jax.random.PRNGKey(0)
    ks = jax.random.split(key, 14)
    s = 0.1
    params = {
        "norm1_w": 1.0 + s * jax.random.normal(ks[0], (Cin,), jnp.float32),
        "norm1_b": s * jax.random.normal(ks[1], (Cin,), jnp.float32),
        "conv1_w": s * jax.random.normal(ks[2], (Cout, Cin, 3), jnp.float32),
        "conv1_b": s * jax.random.normal(ks[3], (Cout,), jnp.float32),
        "time_w": s * jax.random.normal(ks[4], (Cout, T), jnp.float32),
        "time_b": s * jax.random.normal(ks[5], (Cout,), jnp.float32),
        "norm2_w": 1.0 + s * jax.random.normal(ks[6], (Cout,), jnp.float32),
        "norm2_b": s * jax.random.normal(ks[7], (Cout,), jnp.float32),
        "conv2_w": s * jax.random.normal(ks[8], (Cout, Cout, 3), jnp.float32),
        "conv2_b": s * jax.random.normal(ks[9], (Cout,), jnp.float32),
        "short_w": s * jax.random.normal(ks[10], (Cout, Cin), jnp.float32),
        "short_b": s * jax.random.normal(ks[11], (Cout,), jnp.float32),
    }
    x = jax.random.normal(ks[12], (B, Cin, L), jnp.float32)
    temb = jax.random.normal(ks[13], (B, T), jnp.float32)

    out = resnet_block_1d(x, temb, params, groups=G, eps=1e-6, output_scale_factor=1.0)
    out = jax.block_until_ready(out)

    ref = reference_forward(x, temb, params, groups=G, eps=1e-6, output_scale_factor=1.0)
    ref = jax.block_until_ready(ref)

    assert out.shape == (B, Cout, L)
    assert jnp.allclose(out, ref, rtol=2e-3, atol=2e-3), \
        f"max abs err = {float(jnp.max(jnp.abs(out - ref)))}"
    print("KERNEL_OK")
</pallas_src>

<mosaic_0001>
module attributes {stable_mosaic.version = 11 : i64} {
  func.func @kernel(%arg0: i32, %arg1: memref<16x128xf32, #tpu.memory_space<vmem>>, %arg2: memref<128x2xf32, #tpu.memory_space<vmem>>, %arg3: memref<2x128xf32, #tpu.memory_space<vmem>>, %arg4: memref<32x2xf32, #tpu.memory_space<vmem>>, %arg5: memref<16x1xf32, #tpu.memory_space<vmem>>, %arg6: memref<16x1xf32, #tpu.memory_space<vmem>>, %arg7: memref<4x16xf32, #tpu.memory_space<vmem>>, %arg8: memref<16x4xf32, #tpu.memory_space<vmem>>, %arg9: memref<32x48xf32, #tpu.memory_space<vmem>>, %arg10: memref<32x1xf32, #tpu.memory_space<vmem>>, %arg11: memref<32x1xf32, #tpu.memory_space<vmem>>, %arg12: memref<32x1xf32, #tpu.memory_space<vmem>>, %arg13: memref<4x32xf32, #tpu.memory_space<vmem>>, %arg14: memref<32x4xf32, #tpu.memory_space<vmem>>, %arg15: memref<32x96xf32, #tpu.memory_space<vmem>>, %arg16: memref<32x1xf32, #tpu.memory_space<vmem>>, %arg17: memref<32x16xf32, #tpu.memory_space<vmem>>, %arg18: memref<32x1xf32, #tpu.memory_space<vmem>>, %arg19: memref<32x128xf32, #tpu.memory_space<vmem>>) attributes {dimension_semantics = [#tpu.dimension_semantics<parallel>], iteration_bounds = array<i64: 1>, scalar_prefetch = 0 : i64, scratch_operands = 0 : i64, tpu.core_type = #tpu.core_type<tc>, window_params = [{transform_indices = @transform_0, window_bounds = array<i64: 16, 128>}, {transform_indices = @transform_1, window_bounds = array<i64: 128, 2>}, {transform_indices = @transform_2, window_bounds = array<i64: 2, 128>}, {pipeline_mode = #tpu.pipeline_mode<synchronous>, transform_indices = @transform_3, window_bounds = array<i64: 32, 2>}, {pipeline_mode = #tpu.pipeline_mode<synchronous>, transform_indices = @transform_4, window_bounds = array<i64: 16, 1>}, {pipeline_mode = #tpu.pipeline_mode<synchronous>, transform_indices = @transform_5, window_bounds = array<i64: 16, 1>}, {pipeline_mode = #tpu.pipeline_mode<synchronous>, transform_indices = @transform_6, window_bounds = array<i64: 4, 16>}, {pipeline_mode = #tpu.pipeline_mode<synchronous>, transform_indices = @transform_7, window_bounds = array<i64: 16, 4>}, {pipeline_mode = #tpu.pipeline_mode<synchronous>, transform_indices = @transform_8, window_bounds = array<i64: 32, 48>}, {pipeline_mode = #tpu.pipeline_mode<synchronous>, transform_indices = @transform_9, window_bounds = array<i64: 32, 1>}, {pipeline_mode = #tpu.pipeline_mode<synchronous>, transform_indices = @transform_10, window_bounds = array<i64: 32, 1>}, {pipeline_mode = #tpu.pipeline_mode<synchronous>, transform_indices = @transform_11, window_bounds = array<i64: 32, 1>}, {pipeline_mode = #tpu.pipeline_mode<synchronous>, transform_indices = @transform_12, window_bounds = array<i64: 4, 32>}, {pipeline_mode = #tpu.pipeline_mode<synchronous>, transform_indices = @transform_13, window_bounds = array<i64: 32, 4>}, {pipeline_mode = #tpu.pipeline_mode<synchronous>, transform_indices = @transform_14, window_bounds = array<i64: 32, 96>}, {pipeline_mode = #tpu.pipeline_mode<synchronous>, transform_indices = @transform_15, window_bounds = array<i64: 32, 1>}, {pipeline_mode = #tpu.pipeline_mode<synchronous>, transform_indices = @transform_16, window_bounds = array<i64: 32, 16>}, {pipeline_mode = #tpu.pipeline_mode<synchronous>, transform_indices = @transform_17, window_bounds = array<i64: 32, 1>}, {transform_indices = @transform_18, window_bounds = array<i64: 32, 128>}]} {
    %c0 = arith.constant 0 : index
    %c0_0 = arith.constant 0 : index
    %0 = vector.load %arg1[%c0, %c0_0] : memref<16x128xf32, #tpu.memory_space<vmem>>, vector<16x128xf32>
    %c0_1 = arith.constant 0 : index
    %c0_2 = arith.constant 0 : index
    %1 = vector.load %arg2[%c0_1, %c0_2] : memref<128x2xf32, #tpu.memory_space<vmem>>, vector<128x2xf32>
    %c0_3 = arith.constant 0 : index
    %c0_4 = arith.constant 0 : index
    %2 = vector.load %arg3[%c0_3, %c0_4] : memref<2x128xf32, #tpu.memory_space<vmem>>, vector<2x128xf32>
    %c0_5 = arith.constant 0 : index
    %c0_6 = arith.constant 0 : index
    %3 = vector.load %arg7[%c0_5, %c0_6] : memref<4x16xf32, #tpu.memory_space<vmem>>, vector<4x16xf32>
    %c0_7 = arith.constant 0 : index
    %c0_8 = arith.constant 0 : index
    %4 = vector.load %arg8[%c0_7, %c0_8] : memref<16x4xf32, #tpu.memory_space<vmem>>, vector<16x4xf32>
    %c0_9 = arith.constant 0 : index
    %c0_10 = arith.constant 0 : index
    %5 = vector.load %arg5[%c0_9, %c0_10] : memref<16x1xf32, #tpu.memory_space<vmem>>, vector<16x1xf32>
    %c0_11 = arith.constant 0 : index
    %c0_12 = arith.constant 0 : index
    %6 = vector.load %arg6[%c0_11, %c0_12] : memref<16x1xf32, #tpu.memory_space<vmem>>, vector<16x1xf32>
    %cst = arith.constant dense<0.000000e+00> : vector<16x2xf32>
    %7 = tpu.matmul %0, %1, %cst {dimension_numbers = #tpu.dot_dimension_numbers<[1], [0], [0], [1], [0, 0, 1, 1], [], []>} : vector<16x128xf32>, vector<128x2xf32>, vector<16x2xf32> -> vector<16x2xf32>
    %8 = arith.mulf %0, %0 : vector<16x128xf32>
    %cst_13 = arith.constant dense<0.000000e+00> : vector<16x2xf32>
    %9 = tpu.matmul %8, %1, %cst_13 {dimension_numbers = #tpu.dot_dimension_numbers<[1], [0], [0], [1], [0, 0, 1, 1], [], []>} : vector<16x128xf32>, vector<128x2xf32>, vector<16x2xf32> -> vector<16x2xf32>
    %cst_14 = arith.constant dense<0.000000e+00> : vector<4x2xf32>
    %10 = tpu.matmul %3, %7, %cst_14 {dimension_numbers = #tpu.dot_dimension_numbers<[1], [0], [0], [1], [0, 0, 1, 1], [], []>} : vector<4x16xf32>, vector<16x2xf32>, vector<4x2xf32> -> vector<4x2xf32>
    %cst_15 = arith.constant dense<0.000000e+00> : vector<4x2xf32>
    %11 = tpu.matmul %3, %9, %cst_15 {dimension_numbers = #tpu.dot_dimension_numbers<[1], [0], [0], [1], [0, 0, 1, 1], [], []>} : vector<4x16xf32>, vector<16x2xf32>, vector<4x2xf32> -> vector<4x2xf32>
    %cst_16 = arith.constant 3.906250e-03 : f32
    %12 = vector.broadcast %cst_16 : f32 to vector<4x2xf32>
    %13 = arith.mulf %10, %12 : vector<4x2xf32>
    %cst_17 = arith.constant 3.906250e-03 : f32
    %14 = vector.broadcast %cst_17 : f32 to vector<4x2xf32>
    %15 = arith.mulf %11, %14 : vector<4x2xf32>
    %16 = arith.mulf %13, %13 : vector<4x2xf32>
    %17 = arith.subf %15, %16 : vector<4x2xf32>
    %cst_18 = arith.constant 0.000000e+00 : f32
    %18 = vector.broadcast %cst_18 : f32 to vector<4x2xf32>
    %19 = arith.maximumf %17, %18 : vector<4x2xf32>
    %cst_19 = arith.constant 9.99999997E-7 : f32
    %20 = vector.broadcast %cst_19 : f32 to vector<4x2xf32>
    %21 = arith.addf %19, %20 : vector<4x2xf32>
    %22 = math.rsqrt %21 : vector<4x2xf32>
    %cst_20 = arith.constant dense<0.000000e+00> : vector<16x2xf32>
    %23 = tpu.matmul %4, %13, %cst_20 {dimension_numbers = #tpu.dot_dimension_numbers<[1], [0], [0], [1], [0, 0, 1, 1], [], []>} : vector<16x4xf32>, vector<4x2xf32>, vector<16x2xf32> -> vector<16x2xf32>
    %cst_21 = arith.constant dense<0.000000e+00> : vector<16x128xf32>
    %24 = tpu.matmul %23, %2, %cst_21 {dimension_numbers = #tpu.dot_dimension_numbers<[1], [0], [0], [1], [0, 0, 1, 1], [], []>} : vector<16x2xf32>, vector<2x128xf32>, vector<16x128xf32> -> vector<16x128xf32>
    %cst_22 = arith.constant dense<0.000000e+00> : vector<16x2xf32>
    %25 = tpu.matmul %4, %22, %cst_22 {dimension_numbers = #tpu.dot_dimension_numbers<[1], [0], [0], [1], [0, 0, 1, 1], [], []>} : vector<16x4xf32>, vector<4x2xf32>, vector<16x2xf32> -> vector<16x2xf32>
    %cst_23 = arith.constant dense<0.000000e+00> : vector<16x128xf32>
    %26 = tpu.matmul %25, %2, %cst_23 {dimension_numbers = #tpu.dot_dimension_numbers<[1], [0], [0], [1], [0, 0, 1, 1], [], []>} : vector<16x2xf32>, vector<2x128xf32>, vector<16x128xf32> -> vector<16x128xf32>
    %27 = arith.subf %0, %24 : vector<16x128xf32>
    %28 = arith.mulf %27, %26 : vector<16x128xf32>
    %29 = vector.broadcast %5 : vector<16x1xf32> to vector<16x128xf32>
    %30 = arith.mulf %28, %29 : vector<16x128xf32>
    %31 = vector.broadcast %6 : vector<16x1xf32> to vector<16x128xf32>
    %32 = arith.addf %30, %31 : vector<16x128xf32>
    %33 = arith.negf %32 : vector<16x128xf32>
    %34 = math.exp %33 : vector<16x128xf32>
    %cst_24 = arith.constant 1.000000e+00 : f32
    %35 = vector.broadcast %cst_24 : f32 to vector<16x128xf32>
    %36 = arith.addf %35, %34 : vector<16x128xf32>
    %37 = arith.divf %35, %36 : vector<16x128xf32>
    %38 = arith.mulf %32, %37 : vector<16x128xf32>
    %c0_25 = arith.constant 0 : index
    %c0_26 = arith.constant 0 : index
    %39 = vector.load %arg9[%c0_25, %c0_26] : memref<32x48xf32, #tpu.memory_space<vmem>>, vector<32x48xf32>
    %c0_27 = arith.constant 0 : index
    %c0_28 = arith.constant 0 : index
    %40 = vector.load %arg10[%c0_27, %c0_28] : memref<32x1xf32, #tpu.memory_space<vmem>>, vector<32x1xf32>
    %41 = tpu.iota {dimensions = array<i32: 1>} : vector<16x128xi32>
    %c64_i32 = arith.constant 64 : i32
    %c0_i32 = arith.constant 0 : i32
    %42 = arith.cmpi eq, %c64_i32, %c0_i32 : i32
    %c1_i32 = arith.constant 1 : i32
    %43 = arith.select %42, %c1_i32, %c64_i32 : i32
    %44 = vector.broadcast %43 : i32 to vector<16x128xi32>
    %45 = arith.remsi %41, %44 : vector<16x128xi32>
    %c0_i32_29 = arith.constant 0 : i32
    %46 = vector.broadcast %c0_i32_29 : i32 to vector<16x128xi32>
    %47 = arith.cmpi ne, %45, %46 : vector<16x128xi32>
    %c0_i32_30 = arith.constant 0 : i32
    %48 = vector.broadcast %c0_i32_30 : i32 to vector<16x128xi32>
    %49 = arith.cmpi slt, %45, %48 : vector<16x128xi32>
    %c0_i32_31 = arith.constant 0 : i32
    %50 = arith.cmpi slt, %43, %c0_i32_31 : i32
    %51 = vector.broadcast %50 : i1 to vector<16x128xi1>
    %52 = vector.broadcast %51 : vector<16x128xi1> to vector<16x128xi1>
    %53 = arith.xori %49, %52 : vector<16x128xi1>
    %54 = arith.andi %53, %47 : vector<16x128xi1>
    %55 = vector.broadcast %43 : i32 to vector<16x128xi32>
    %56 = arith.addi %45, %55 : vector<16x128xi32>
    %57 = arith.select %54, %56, %45 : vector<16x128xi1>, vector<16x128xi32>
    %c0_i32_32 = arith.constant 0 : i32
    %58 = vector.broadcast %c0_i32_32 : i32 to vector<16x128xi32>
    %59 = arith.cmpi eq, %57, %58 : vector<16x128xi32>
    %c1_i32_33 = arith.constant 1 : i32
    %60 = tpu.dynamic_rotate %38 by %c1_i32_33 dim 1 : vector<16x128xf32>, i32 -> vector<16x128xf32>
    %cst_34 = arith.constant 0.000000e+00 : f32
    %61 = vector.broadcast %cst_34 : f32 to vector<16x128xf32>
    %62 = arith.select %59, %61, %60 : vector<16x128xi1>, vector<16x128xf32>
    %c63_i32 = arith.constant 63 : i32
    %63 = vector.broadcast %c63_i32 : i32 to vector<16x128xi32>
    %64 = arith.cmpi eq, %57, %63 : vector<16x128xi32>
    %c127_i32 = arith.constant 127 : i32
    %65 = tpu.dynamic_rotate %38 by %c127_i32 dim 1 : vector<16x128xf32>, i32 -> vector<16x128xf32>
    %cst_35 = arith.constant 0.000000e+00 : f32
    %66 = vector.broadcast %cst_35 : f32 to vector<16x128xf32>
    %67 = arith.select %64, %66, %65 : vector<16x128xi1>, vector<16x128xf32>
    %68 = tpu.concatenate %62, %38, %67 in 0 : vector<16x128xf32>, vector<16x128xf32>, vector<16x128xf32> -> vector<48x128xf32>
    %cst_36 = arith.constant dense<0.000000e+00> : vector<32x128xf32>
    %69 = tpu.matmul %39, %68, %cst_36 {dimension_numbers = #tpu.dot_dimension_numbers<[1], [0], [0], [1], [0, 0, 1, 1], [], []>} : vector<32x48xf32>, vector<48x128xf32>, vector<32x128xf32> -> vector<32x128xf32>
    %70 = vector.broadcast %40 : vector<32x1xf32> to vector<32x128xf32>
    %71 = arith.addf %69, %70 : vector<32x128xf32>
    %c0_37 = arith.constant 0 : index
    %c0_38 = arith.constant 0 : index
    %72 = vector.load %arg4[%c0_37, %c0_38] : memref<32x2xf32, #tpu.memory_space<vmem>>, vector<32x2xf32>
    %cst_39 = arith.constant dense<0.000000e+00> : vector<32x128xf32>
    %73 = tpu.matmul %72, %2, %cst_39 {dimension_numbers = #tpu.dot_dimension_numbers<[1], [0], [0], [1], [0, 0, 1, 1], [], []>} : vector<32x2xf32>, vector<2x128xf32>, vector<32x128xf32> -> vector<32x128xf32>
    %74 = arith.addf %71, %73 : vector<32x128xf32>
    %c0_40 = arith.constant 0 : index
    %c0_41 = arith.constant 0 : index
    %75 = vector.load %arg13[%c0_40, %c0_41] : memref<4x32xf32, #tpu.memory_space<vmem>>, vector<4x32xf32>
    %c0_42 = arith.constant 0 : index
    %c0_43 = arith.constant 0 : index
    %76 = vector.load %arg14[%c0_42, %c0_43] : memref<32x4xf32, #tpu.memory_space<vmem>>, vector<32x4xf32>
    %c0_44 = arith.constant 0 : index
    %c0_45 = arith.constant 0 : index
    %77 = vector.load %arg11[%c0_44, %c0_45] : memref<32x1xf32, #tpu.memory_space<vmem>>, vector<32x1xf32>
    %c0_46 = arith.constant 0 : index
    %c0_47 = arith.constant 0 : index
    %78 = vector.load %arg12[%c0_46, %c0_47] : memref<32x1xf32, #tpu.memory_space<vmem>>, vector<32x1xf32>
    %cst_48 = arith.constant dense<0.000000e+00> : vector<32x2xf32>
    %79 = tpu.matmul %74, %1, %cst_48 {dimension_numbers = #tpu.dot_dimension_numbers<[1], [0], [0], [1], [0, 0, 1, 1], [], []>} : vector<32x128xf32>, vector<128x2xf32>, vector<32x2xf32> -> vector<32x2xf32>
    %80 = arith.mulf %74, %74 : vector<32x128xf32>
    %cst_49 = arith.constant dense<0.000000e+00> : vector<32x2xf32>
    %81 = tpu.matmul %80, %1, %cst_49 {dimension_numbers = #tpu.dot_dimension_numbers<[1], [0], [0], [1], [0, 0, 1, 1], [], []>} : vector<32x128xf32>, vector<128x2xf32>, vector<32x2xf32> -> vector<32x2xf32>
    %cst_50 = arith.constant dense<0.000000e+00> : vector<4x2xf32>
    %82 = tpu.matmul %75, %79, %cst_50 {dimension_numbers = #tpu.dot_dimension_numbers<[1], [0], [0], [1], [0, 0, 1, 1], [], []>} : vector<4x32xf32>, vector<32x2xf32>, vector<4x2xf32> -> vector<4x2xf32>
    %cst_51 = arith.constant dense<0.000000e+00> : vector<4x2xf32>
    %83 = tpu.matmul %75, %81, %cst_51 {dimension_numbers = #tpu.dot_dimension_numbers<[1], [0], [0], [1], [0, 0, 1, 1], [], []>} : vector<4x32xf32>, vector<32x2xf32>, vector<4x2xf32> -> vector<4x2xf32>
    %cst_52 = arith.constant 0.001953125 : f32
    %84 = vector.broadcast %cst_52 : f32 to vector<4x2xf32>
    %85 = arith.mulf %82, %84 : vector<4x2xf32>
    %cst_53 = arith.constant 0.001953125 : f32
    %86 = vector.broadcast %cst_53 : f32 to vector<4x2xf32>
    %87 = arith.mulf %83, %86 : vector<4x2xf32>
    %88 = arith.mulf %85, %85 : vector<4x2xf32>
    %89 = arith.subf %87, %88 : vector<4x2xf32>
    %cst_54 = arith.constant 0.000000e+00 : f32
    %90 = vector.broadcast %cst_54 : f32 to vector<4x2xf32>
    %91 = arith.maximumf %89, %90 : vector<4x2xf32>
    %cst_55 = arith.constant 9.99999997E-7 : f32
    %92 = vector.broadcast %cst_55 : f32 to vector<4x2xf32>
    %93 = arith.addf %91, %92 : vector<4x2xf32>
    %94 = math.rsqrt %93 : vector<4x2xf32>
    %cst_56 = arith.constant dense<0.000000e+00> : vector<32x2xf32>
    %95 = tpu.matmul %76, %85, %cst_56 {dimension_numbers = #tpu.dot_dimension_numbers<[1], [0], [0], [1], [0, 0, 1, 1], [], []>} : vector<32x4xf32>, vector<4x2xf32>, vector<32x2xf32> -> vector<32x2xf32>
    %cst_57 = arith.constant dense<0.000000e+00> : vector<32x128xf32>
    %96 = tpu.matmul %95, %2, %cst_57 {dimension_numbers = #tpu.dot_dimension_numbers<[1], [0], [0], [1], [0, 0, 1, 1], [], []>} : vector<32x2xf32>, vector<2x128xf32>, vector<32x128xf32> -> vector<32x128xf32>
    %cst_58 = arith.constant dense<0.000000e+00> : vector<32x2xf32>
    %97 = tpu.matmul %76, %94, %cst_58 {dimension_numbers = #tpu.dot_dimension_numbers<[1], [0], [0], [1], [0, 0, 1, 1], [], []>} : vector<32x4xf32>, vector<4x2xf32>, vector<32x2xf32> -> vector<32x2xf32>
    %cst_59 = arith.constant dense<0.000000e+00> : vector<32x128xf32>
    %98 = tpu.matmul %97, %2, %cst_59 {dimension_numbers = #tpu.dot_dimension_numbers<[1], [0], [0], [1], [0, 0, 1, 1], [], []>} : vector<32x2xf32>, vector<2x128xf32>, vector<32x128xf32> -> vector<32x128xf32>
    %99 = arith.subf %74, %96 : vector<32x128xf32>
    %100 = arith.mulf %99, %98 : vector<32x128xf32>
    %101 = vector.broadcast %77 : vector<32x1xf32> to vector<32x128xf32>
    %102 = arith.mulf %100, %101 : vector<32x128xf32>
    %103 = vector.broadcast %78 : vector<32x1xf32> to vector<32x128xf32>
    %104 = arith.addf %102, %103 : vector<32x128xf32>
    %105 = arith.negf %104 : vector<32x128xf32>
    %106 = math.exp %105 : vector<32x128xf32>
    %cst_60 = arith.constant 1.000000e+00 : f32
    %107 = vector.broadcast %cst_60 : f32 to vector<32x128xf32>
    %108 = arith.addf %107, %106 : vector<32x128xf32>
    %109 = arith.divf %107, %108 : vector<32x128xf32>
    %110 = arith.mulf %104, %109 : vector<32x128xf32>
    %c0_61 = arith.constant 0 : index
    %c0_62 = arith.constant 0 : index
    %111 = vector.load %arg15[%c0_61, %c0_62] : memref<32x96xf32, #tpu.memory_space<vmem>>, vector<32x96xf32>
    %c0_63 = arith.constant 0 : index
    %c0_64 = arith.constant 0 : index
    %112 = vector.load %arg16[%c0_63, %c0_64] : memref<32x1xf32, #tpu.memory_space<vmem>>, vector<32x1xf32>
    %113 = tpu.iota {dimensions = array<i32: 1>} : vector<32x128xi32>
    %c64_i32_65 = arith.constant 64 : i32
    %c0_i32_66 = arith.constant 0 : i32
    %114 = arith.cmpi eq, %c64_i32_65, %c0_i32_66 : i32
    %c1_i32_67 = arith.constant 1 : i32
    %115 = arith.select %114, %c1_i32_67, %c64_i32_65 : i32
    %116 = vector.broadcast %115 : i32 to vector<32x128xi32>
    %117 = arith.remsi %113, %116 : vector<32x128xi32>
    %c0_i32_68 = arith.constant 0 : i32
    %118 = vector.broadcast %c0_i32_68 : i32 to vector<32x128xi32>
    %119 = arith.cmpi ne, %117, %118 : vector<32x128xi32>
    %c0_i32_69 = arith.constant 0 : i32
    %120 = vector.broadcast %c0_i32_69 : i32 to vector<32x128xi32>
    %121 = arith.cmpi slt, %117, %120 : vector<32x128xi32>
    %c0_i32_70 = arith.constant 0 : i32
    %122 = arith.cmpi slt, %115, %c0_i32_70 : i32
    %123 = vector.broadcast %122 : i1 to vector<32x128xi1>
    %124 = vector.broadcast %123 : vector<32x128xi1> to vector<32x128xi1>
    %125 = arith.xori %121, %124 : vector<32x128xi1>
    %126 = arith.andi %125, %119 : vector<32x128xi1>
    %127 = vector.broadcast %115 : i32 to vector<32x128xi32>
    %128 = arith.addi %117, %127 : vector<32x128xi32>
    %129 = arith.select %126, %128, %117 : vector<32x128xi1>, vector<32x128xi32>
    %c0_i32_71 = arith.constant 0 : i32
    %130 = vector.broadcast %c0_i32_71 : i32 to vector<32x128xi32>
    %131 = arith.cmpi eq, %129, %130 : vector<32x128xi32>
    %c1_i32_72 = arith.constant 1 : i32
    %132 = tpu.dynamic_rotate %110 by %c1_i32_72 dim 1 : vector<32x128xf32>, i32 -> vector<32x128xf32>
    %cst_73 = arith.constant 0.000000e+00 : f32
    %133 = vector.broadcast %cst_73 : f32 to vector<32x128xf32>
    %134 = arith.select %131, %133, %132 : vector<32x128xi1>, vector<32x128xf32>
    %c63_i32_74 = arith.constant 63 : i32
    %135 = vector.broadcast %c63_i32_74 : i32 to vector<32x128xi32>
    %136 = arith.cmpi eq, %129, %135 : vector<32x128xi32>
    %c127_i32_75 = arith.constant 127 : i32
    %137 = tpu.dynamic_rotate %110 by %c127_i32_75 dim 1 : vector<32x128xf32>, i32 -> vector<32x128xf32>
    %cst_76 = arith.constant 0.000000e+00 : f32
    %138 = vector.broadcast %cst_76 : f32 to vector<32x128xf32>
    %139 = arith.select %136, %138, %137 : vector<32x128xi1>, vector<32x128xf32>
    %140 = tpu.concatenate %134, %110, %139 in 0 : vector<32x128xf32>, vector<32x128xf32>, vector<32x128xf32> -> vector<96x128xf32>
    %cst_77 = arith.constant dense<0.000000e+00> : vector<32x128xf32>
    %141 = tpu.matmul %111, %140, %cst_77 {dimension_numbers = #tpu.dot_dimension_numbers<[1], [0], [0], [1], [0, 0, 1, 1], [], []>} : vector<32x96xf32>, vector<96x128xf32>, vector<32x128xf32> -> vector<32x128xf32>
    %142 = vector.broadcast %112 : vector<32x1xf32> to vector<32x128xf32>
    %143 = arith.addf %141, %142 : vector<32x128xf32>
    %c0_78 = arith.constant 0 : index
    %c0_79 = arith.constant 0 : index
    %144 = vector.load %arg17[%c0_78, %c0_79] : memref<32x16xf32, #tpu.memory_space<vmem>>, vector<32x16xf32>
    %cst_80 = arith.constant dense<0.000000e+00> : vector<32x128xf32>
    %145 = tpu.matmul %144, %0, %cst_80 {dimension_numbers = #tpu.dot_dimension_numbers<[1], [0], [0], [1], [0, 0, 1, 1], [], []>} : vector<32x16xf32>, vector<16x128xf32>, vector<32x128xf32> -> vector<32x128xf32>
    %c0_81 = arith.constant 0 : index
    %c0_82 = arith.constant 0 : index
    %146 = vector.load %arg18[%c0_81, %c0_82] : memref<32x1xf32, #tpu.memory_space<vmem>>, vector<32x1xf32>
    %147 = vector.broadcast %146 : vector<32x1xf32> to vector<32x128xf32>
    %148 = arith.addf %145, %147 : vector<32x128xf32>
    %149 = arith.addf %148, %143 : vector<32x128xf32>
    %cst_83 = arith.constant 1.000000e+00 : f32
    %150 = vector.broadcast %cst_83 : f32 to vector<32x128xf32>
    %151 = arith.mulf %149, %150 : vector<32x128xf32>
    %c0_84 = arith.constant 0 : index
    %c0_85 = arith.constant 0 : index
    %152 = vector.load %arg19[%c0_84, %c0_85] : memref<32x128xf32, #tpu.memory_space<vmem>>, vector<32x128xf32>
    tpu.vector_store %arg19[%c0_84, %c0_85], %151 {strides = array<i32>} : memref<32x128xf32, #tpu.memory_space<vmem>>, vector<32x128xf32>,
    return
  }
  func.func @transform_0(%arg0: i32) -> (i32, i32) {
    %c0_i32 = arith.constant 0 : i32
    %c0_i32_0 = arith.constant 0 : i32
    return %c0_i32, %arg0 : i32, i32
  }
  func.func @transform_1(%arg0: i32) -> (i32, i32) {
    %c0_i32 = arith.constant 0 : i32
    %c0_i32_0 = arith.constant 0 : i32
    return %arg0, %c0_i32 : i32, i32
  }
  func.func @transform_2(%arg0: i32) -> (i32, i32) {
    %c0_i32 = arith.constant 0 : i32
    %c0_i32_0 = arith.constant 0 : i32
    return %c0_i32, %arg0 : i32, i32
  }
  func.func @transform_3(%arg0: i32) -> (i32, i32) {
    %c0_i32 = arith.constant 0 : i32
    %c0_i32_0 = arith.constant 0 : i32
    %c0_i32_1 = arith.constant 0 : i32
    return %c0_i32, %c0_i32_0 : i32, i32
  }
  func.func @transform_4(%arg0: i32) -> (i32, i32) {
    %c0_i32 = arith.constant 0 : i32
    %c0_i32_0 = arith.constant 0 : i32
    %c0_i32_1 = arith.constant 0 : i32
    return %c0_i32, %c0_i32_0 : i32, i32
  }
  func.func @transform_5(%arg0: i32) -> (i32, i32) {
    %c0_i32 = arith.constant 0 : i32
    %c0_i32_0 = arith.constant 0 : i32
    %c0_i32_1 = arith.constant 0 : i32
    return %c0_i32, %c0_i32_0 : i32, i32
  }
  func.func @transform_6(%arg0: i32) -> (i32, i32) {
    %c0_i32 = arith.constant 0 : i32
    %c0_i32_0 = arith.constant 0 : i32
    %c0_i32_1 = arith.constant 0 : i32
    return %c0_i32, %c0_i32_0 : i32, i32
  }
  func.func @transform_7(%arg0: i32) -> (i32, i32) {
    %c0_i32 = arith.constant 0 : i32
    %c0_i32_0 = arith.constant 0 : i32
    %c0_i32_1 = arith.constant 0 : i32
    return %c0_i32, %c0_i32_0 : i32, i32
  }
  func.func @transform_8(%arg0: i32) -> (i32, i32) {
    %c0_i32 = arith.constant 0 : i32
    %c0_i32_0 = arith.constant 0 : i32
    %c0_i32_1 = arith.constant 0 : i32
    return %c0_i32, %c0_i32_0 : i32, i32
  }
  func.func @transform_9(%arg0: i32) -> (i32, i32) {
    %c0_i32 = arith.constant 0 : i32
    %c0_i32_0 = arith.constant 0 : i32
    %c0_i32_1 = arith.constant 0 : i32
    return %c0_i32, %c0_i32_0 : i32, i32
  }
  func.func @transform_10(%arg0: i32) -> (i32, i32) {
    %c0_i32 = arith.constant 0 : i32
    %c0_i32_0 = arith.constant 0 : i32
    %c0_i32_1 = arith.constant 0 : i32
    return %c0_i32, %c0_i32_0 : i32, i32
  }
  func.func @transform_11(%arg0: i32) -> (i32, i32) {
    %c0_i32 = arith.constant 0 : i32
    %c0_i32_0 = arith.constant 0 : i32
    %c0_i32_1 = arith.constant 0 : i32
    return %c0_i32, %c0_i32_0 : i32, i32
  }
  func.func @transform_12(%arg0: i32) -> (i32, i32) {
    %c0_i32 = arith.constant 0 : i32
    %c0_i32_0 = arith.constant 0 : i32
    %c0_i32_1 = arith.constant 0 : i32
    return %c0_i32, %c0_i32_0 : i32, i32
  }
  func.func @transform_13(%arg0: i32) -> (i32, i32) {
    %c0_i32 = arith.constant 0 : i32
    %c0_i32_0 = arith.constant 0 : i32
    %c0_i32_1 = arith.constant 0 : i32
    return %c0_i32, %c0_i32_0 : i32, i32
  }
  func.func @transform_14(%arg0: i32) -> (i32, i32) {
    %c0_i32 = arith.constant 0 : i32
    %c0_i32_0 = arith.constant 0 : i32
    %c0_i32_1 = arith.constant 0 : i32
    return %c0_i32, %c0_i32_0 : i32, i32
  }
  func.func @transform_15(%arg0: i32) -> (i32, i32) {
    %c0_i32 = arith.constant 0 : i32
    %c0_i32_0 = arith.constant 0 : i32
    %c0_i32_1 = arith.constant 0 : i32
    return %c0_i32, %c0_i32_0 : i32, i32
  }
  func.func @transform_16(%arg0: i32) -> (i32, i32) {
    %c0_i32 = arith.constant 0 : i32
    %c0_i32_0 = arith.constant 0 : i32
    %c0_i32_1 = arith.constant 0 : i32
    return %c0_i32, %c0_i32_0 : i32, i32
  }
  func.func @transform_17(%arg0: i32) -> (i32, i32) {
    %c0_i32 = arith.constant 0 : i32
    %c0_i32_0 = arith.constant 0 : i32
    %c0_i32_1 = arith.constant 0 : i32
    return %c0_i32, %c0_i32_0 : i32, i32
  }
  func.func @transform_18(%arg0: i32) -> (i32, i32) {
    %c0_i32 = arith.constant 0 : i32
    %c0_i32_0 = arith.constant 0 : i32
    return %c0_i32, %arg0 : i32, i32
  }
}

</mosaic_0001>

<llo_original>
// kernel: tpu_custom_call.1
$region0: #{tpu_custom_call.1}
  #allocation0 [shape = 'u32[]', space=smem, size = 0x4, offset = 0x4, fixed_abs, tag = 'smem constant byte address 0x4 - core index']
  #allocation1 [shape = 'u32[144,128]{1,0:T(1,128)}', space=vmem, size = 0x12000, scoped, tag = 'internal scratch']
  %s0 = inlined_call_operand.vmem [shape: f32[16,128], index: 0, kind: input, shape index: {}]
  %s1 = inlined_call_operand.vmem [shape: f32[128,2], index: 1, kind: input, shape index: {}]
  %s2 = inlined_call_operand.vmem [shape: f32[2,128], index: 2, kind: input, shape index: {}]
  %s3 = inlined_call_operand.vmem [shape: f32[32,2], index: 3, kind: input, shape index: {}]
  %s4 = inlined_call_operand.vmem [shape: f32[16,1], index: 4, kind: input, shape index: {}]
  %s5 = inlined_call_operand.vmem [shape: f32[16,1], index: 5, kind: input, shape index: {}]
  %s6 = inlined_call_operand.vmem [shape: f32[4,16], index: 6, kind: input, shape index: {}]
  %s7 = inlined_call_operand.vmem [shape: f32[16,4], index: 7, kind: input, shape index: {}]
  %s8 = inlined_call_operand.vmem [shape: f32[32,48], index: 8, kind: input, shape index: {}]
  %s9 = inlined_call_operand.vmem [shape: f32[32,1], index: 9, kind: input, shape index: {}]
  %s10 = inlined_call_operand.vmem [shape: f32[32,1], index: 10, kind: input, shape index: {}]
  %s11 = inlined_call_operand.vmem [shape: f32[32,1], index: 11, kind: input, shape index: {}]
  %s12 = inlined_call_operand.vmem [shape: f32[4,32], index: 12, kind: input, shape index: {}]
  %s13 = inlined_call_operand.vmem [shape: f32[32,4], index: 13, kind: input, shape index: {}]
  %s14 = inlined_call_operand.vmem [shape: f32[32,96], index: 14, kind: input, shape index: {}]
  %s15 = inlined_call_operand.vmem [shape: f32[32,1], index: 15, kind: input, shape index: {}]
  %s16 = inlined_call_operand.vmem [shape: f32[32,16], index: 16, kind: input, shape index: {}]
  %s17 = inlined_call_operand.vmem [shape: f32[32,1], index: 17, kind: input, shape index: {}]
  %s18 = inlined_call_operand.hbm [shape: f32[32,128], index: 18, kind: output, shape index: {}]
  %s19 = sld [smem:[#allocation0]]
  $region82: #{tpu_custom_call.1} parent=0
    _
  %s21 = ssub.s32 1, %s19
  %s22 = scalar_select 0, %s21, %s19
  $region1: #{tpu_custom_call.1} parent=0
    #allocation2 [shape = 'u8[16384]{0}', space=vmem, size = 0x4000, scoped, tag = 'output window, operand 0, single buffered']
    #allocation3 [shape = 's32[1]{0}', space=sflag, size = 0x4, scoped, tag = 'scoped memory for tpu_custom_call.1']
    %23 = vsyncpa [#allocation3], 0
    // Predicated region
    $region2: #{tpu_custom_call.1} parent=1 // pred_check
      _
    $region3: #{tpu_custom_call.1} parent=1 // pred_check_branch
      %25 = sbr.rel (0) target = $region5
    $region4: #{tpu_custom_call.1} parent=1 // pred_region
      _
    $region5: #{tpu_custom_call.1} parent=1 // pred_fallthru
      _
    // Predicated region
    $region6: #{tpu_custom_call.1} parent=1 // pred_check
      _
    $region7: #{tpu_custom_call.1} parent=1 // pred_check_branch
      %27 = sbr.rel (0) target = $region9
    $region8: #{tpu_custom_call.1} parent=1 // pred_region
      _
    $region9: #{tpu_custom_call.1} parent=1 // pred_fallthru
      _
    // Predicated region
    $region10: #{tpu_custom_call.1} parent=1 // pred_check
      _
    $region11: #{tpu_custom_call.1} parent=1 // pred_check_branch
      %29 = sbr.rel (0) target = $region13
    $region12: #{tpu_custom_call.1} parent=1 // pred_region
      _
    $region13: #{tpu_custom_call.1} parent=1 // pred_fallthru
      _
    // Predicated region
    $region14: #{tpu_custom_call.1} parent=1 // pred_check
      _
    $region15: #{tpu_custom_call.1} parent=1 // pred_check_branch
      %31 = sbr.rel (0) target = $region17
    $region16: #{tpu_custom_call.1} parent=1 // pred_region
      _
    $region17: #{tpu_custom_call.1} parent=1 // pred_fallthru
      _
    // Predicated region
    $region18: #{tpu_custom_call.1} parent=1 // pred_check
      _
    $region19: #{tpu_custom_call.1} parent=1 // pred_check_branch
      %33 = sbr.rel (0) target = $region21
    $region20: #{tpu_custom_call.1} parent=1 // pred_region
      _
    $region21: #{tpu_custom_call.1} parent=1 // pred_fallthru
      _
    // Predicated region
    $region22: #{tpu_custom_call.1} parent=1 // pred_check
      _
    $region23: #{tpu_custom_call.1} parent=1 // pred_check_branch
      %35 = sbr.rel (0) target = $region25
    $region24: #{tpu_custom_call.1} parent=1 // pred_region
      _
    $region25: #{tpu_custom_call.1} parent=1 // pred_fallthru
      _
    // Predicated region
    $region26: #{tpu_custom_call.1} parent=1 // pred_check
      _
    $region27: #{tpu_custom_call.1} parent=1 // pred_check_branch
      %37 = sbr.rel (0) target = $region29
    $region28: #{tpu_custom_call.1} parent=1 // pred_region
      _
    $region29: #{tpu_custom_call.1} parent=1 // pred_fallthru
      _
    // Predicated region
    $region30: #{tpu_custom_call.1} parent=1 // pred_check
      _
    $region31: #{tpu_custom_call.1} parent=1 // pred_check_branch
      %39 = sbr.rel (0) target = $region33
    $region32: #{tpu_custom_call.1} parent=1 // pred_region
      _
    $region33: #{tpu_custom_call.1} parent=1 // pred_fallthru
      _
    // Predicated region
    $region34: #{tpu_custom_call.1} parent=1 // pred_check
      _
    $region35: #{tpu_custom_call.1} parent=1 // pred_check_branch
      %41 = sbr.rel (0) target = $region37
    $region36: #{tpu_custom_call.1} parent=1 // pred_region
      _
    $region37: #{tpu_custom_call.1} parent=1 // pred_fallthru
      _
    // Predicated region
    $region38: #{tpu_custom_call.1} parent=1 // pred_check
      _
    $region39: #{tpu_custom_call.1} parent=1 // pred_check_branch
      %43 = sbr.rel (0) target = $region41
    $region40: #{tpu_custom_call.1} parent=1 // pred_region
      _
    $region41: #{tpu_custom_call.1} parent=1 // pred_fallthru
      _
    // Predicated region
    $region42: #{tpu_custom_call.1} parent=1 // pred_check
      _
    $region43: #{tpu_custom_call.1} parent=1 // pred_check_branch
      %45 = sbr.rel (0) target = $region45
    $region44: #{tpu_custom_call.1} parent=1 // pred_region
      _
    $region45: #{tpu_custom_call.1} parent=1 // pred_fallthru
      _
    // Predicated region
    $region46: #{tpu_custom_call.1} parent=1 // pred_check
      _
    $region47: #{tpu_custom_call.1} parent=1 // pred_check_branch
      %47 = sbr.rel (0) target = $region49
    $region48: #{tpu_custom_call.1} parent=1 // pred_region
      _
    $region49: #{tpu_custom_call.1} parent=1 // pred_fallthru
      _
    // Predicated region
    $region50: #{tpu_custom_call.1} parent=1 // pred_check
      _
    $region51: #{tpu_custom_call.1} parent=1 // pred_check_branch
      %49 = sbr.rel (0) target = $region53
    $region52: #{tpu_custom_call.1} parent=1 // pred_region
      _
    $region53: #{tpu_custom_call.1} parent=1 // pred_fallthru
      _
    // Predicated region
    $region54: #{tpu_custom_call.1} parent=1 // pred_check
      _
    $region55: #{tpu_custom_call.1} parent=1 // pred_check_branch
      %51 = sbr.rel (0) target = $region57
    $region56: #{tpu_custom_call.1} parent=1 // pred_region
      _
    $region57: #{tpu_custom_call.1} parent=1 // pred_fallthru
      _
    // Predicated region
    $region58: #{tpu_custom_call.1} parent=1 // pred_check
      _
    $region59: #{tpu_custom_call.1} parent=1 // pred_check_branch
      %53 = sbr.rel (0) target = $region61
    $region60: #{tpu_custom_call.1} parent=1 // pred_region
      _
    $region61: #{tpu_custom_call.1} parent=1 // pred_fallthru
      _
    // Predicated region
    $region62: #{tpu_custom_call.1} parent=1 // pred_check
      _
    $region63: #{tpu_custom_call.1} parent=1 // pred_check_branch
      %55 = sbr.rel (0) target = $region65
    $region64: #{tpu_custom_call.1} parent=1 // pred_region
      _
    $region65: #{tpu_custom_call.1} parent=1 // pred_fallthru
      _
    // Predicated region
    $region66: #{tpu_custom_call.1} parent=1 // pred_check
      _
    $region67: #{tpu_custom_call.1} parent=1 // pred_check_branch
      %57 = sbr.rel (0) target = $region69
    $region68: #{tpu_custom_call.1} parent=1 // pred_region
      _
    $region69: #{tpu_custom_call.1} parent=1 // pred_fallthru
      _
    // Predicated region
    $region70: #{tpu_custom_call.1} parent=1 // pred_check
      _
    $region71: #{tpu_custom_call.1} parent=1 // pred_check_branch
      %59 = sbr.rel (0) target = $region73
    $region72: #{tpu_custom_call.1} parent=1 // pred_region
      _
    $region73: #{tpu_custom_call.1} parent=1 // pred_fallthru
      _
    %v60 = vld [vmem:[%s0] sm:$0xff]
    %v61 = vld [vmem:[%s0 + $0x8] sm:$0xff]
    %v62 = vld [vmem:[%s1] sm:$0xff]
    %v63 = vld [vmem:[%s1 + $0x8] sm:$0xff]
    %v64 = vld [vmem:[%s1 + $0x10] sm:$0xff]
    %v65 = vld [vmem:[%s1 + $0x18] sm:$0xff]
    %v66 = vld [vmem:[%s1 + $0x20] sm:$0xff]
    %v67 = vld [vmem:[%s1 + $0x28] sm:$0xff]
    %v68 = vld [vmem:[%s1 + $0x30] sm:$0xff]
    %v69 = vld [vmem:[%s1 + $0x38] sm:$0xff]
    %v70 = vld [vmem:[%s1 + $0x40] sm:$0xff]
    %v71 = vld [vmem:[%s1 + $0x48] sm:$0xff]
    %v72 = vld [vmem:[%s1 + $0x50] sm:$0xff]
    %v73 = vld [vmem:[%s1 + $0x58] sm:$0xff]
    %v74 = vld [vmem:[%s1 + $0x60] sm:$0xff]
    %v75 = vld [vmem:[%s1 + $0x68] sm:$0xff]
    %v76 = vld [vmem:[%s1 + $0x70] sm:$0xff]
    %v77 = vld [vmem:[%s1 + $0x78] sm:$0xff]
    %v78 = vld [vmem:[%s2] sm:$0x3]
    %v79 = vld [vmem:[%s6] sm:$0xf]
    %v80 = vld [vmem:[%s7] sm:$0xff]
    %v81 = vld [vmem:[%s7 + $0x8] sm:$0xff]
    %v82 = vld [vmem:[%s4] sm:$0xff]
    %v83 = vld [vmem:[%s4 + $0x8] sm:$0xff]
    %v84 = vld [vmem:[%s5] sm:$0xff]
    %v85 = vld [vmem:[%s5 + $0x8] sm:$0xff]
    %86 = vmatprep.subr.mxu0 0.0
    %87 = vmatpush1.msra.mxu0 %v62
    %88 = vmatprep.subr.mxu0 0.0
    %89 = vmatpush1.msra.mxu0 %v63
    %90 = vmatprep.subr.mxu0 0.0
    %91 = vmatpush1.msra.mxu0 %v64
    %92 = vmatprep.subr.mxu0 0.0
    %93 = vmatpush1.msra.mxu0 %v65
    %94 = vmatprep.subr.mxu0 0.0
    %95 = vmatpush1.msra.mxu0 %v66
    %96 = vmatprep.subr.mxu0 0.0
    %97 = vmatpush1.msra.mxu0 %v67
    %98 = vmatprep.subr.mxu0 0.0
    %99 = vmatpush1.msra.mxu0 %v68
    %100 = vmatprep.subr.mxu0 0.0
    %101 = vmatpush1.msra.mxu0 %v69
    %102 = vmatprep.subr.mxu0 0.0
    %103 = vmatpush1.msra.mxu0 %v70
    %104 = vmatprep.subr.mxu0 0.0
    %105 = vmatpush1.msra.mxu0 %v71
    %106 = vmatprep.subr.mxu0 0.0
    %107 = vmatpush1.msra.mxu0 %v72
    %108 = vmatprep.subr.mxu0 0.0
    %109 = vmatpush1.msra.mxu0 %v73
    %110 = vmatprep.subr.mxu0 0.0
    %111 = vmatpush1.msra.mxu0 %v74
    %112 = vmatprep.subr.mxu0 0.0
    %113 = vmatpush1.msra.mxu0 %v75
    %114 = vmatprep.subr.mxu0 0.0
    %115 = vmatpush1.msra.mxu0 %v76
    %116 = vmatprep.subr.mxu0 0.0
    %117 = vmatpush1.msra.mxu0 %v77
    %118 = vmatprep.subr.mxu0 0.0
    %119 = vmatpush1.msra.mxu0 0.0
    %120 = vmatprep.subr.mxu0 0.0
    %121 = vmatpush1.msra.mxu0 0.0
    %122 = vmatprep.subr.mxu0 0.0
    %123 = vmatpush1.msra.mxu0 0.0
    %124 = vmatprep.subr.mxu0 0.0
    %125 = vmatpush1.msra.mxu0 0.0
    %126 = vmatprep.subr.mxu0 0.0
    %127 = vmatpush1.msra.mxu0 0.0
    %128 = vmatprep.subr.mxu0 0.0
    %129 = vmatpush1.msra.mxu0 0.0
    %130 = vmatprep.subr.mxu0 0.0
    %131 = vmatpush1.msra.mxu0 0.0
    %132 = vmatprep.subr.mxu0 0.0
    %133 = vmatpush1.msra.mxu0 0.0
    %134 = vmatprep.subr.mxu0 0.0
    %135 = vmatpush1.msra.mxu0 0.0
    %136 = vmatprep.subr.mxu0 0.0
    %137 = vmatpush1.msra.mxu0 0.0
    %138 = vmatprep.subr.mxu0 0.0
    %139 = vmatpush1.msra.mxu0 0.0
    %140 = vmatprep.subr.mxu0 0.0
    %141 = vmatpush1.msra.mxu0 0.0
    %142 = vmatprep.subr.mxu0 0.0
    %143 = vmatpush1.msra.mxu0 0.0
    %144 = vmatprep.subr.mxu0 0.0
    %145 = vmatpush1.msra.mxu0 0.0
    %146 = vmatprep.subr.mxu0 0.0
    %147 = vmatpush1.msra.mxu0 0.0
    %148 = vmatprep.subr.mxu0 0.0
    %149 = vmatpush1.msra.mxu0 0.0
    %150 = vmatprep.mubr.f32.mxu0 0.0
    %151 = vmatmul.mubr.f32.gmra.mrb[0].mxu0 %v60
    %v152 = vpop.f32.mrb[0].mxu0
    %v153 = vadd.f32 0.0, %v152
    %v154 = vpop.f32.mrb[0].mxu0
    %155 = vmatprep.mubr.f32.mxu0 0.0
    %156 = vmatmul.mubr.f32.gmra.mrb[0].mxu0 %v61
    %v157 = vpop.f32.mrb[0].mxu0
    %v158 = vadd.f32 0.0, %v157
    %v159 = vpop.f32.mrb[0].mxu0
    %160 = vdwg.mxu0
    %v161 = vmul.f32 %v60, %v60
    %v162 = vmul.f32 %v61, %v61
    %163 = vmatprep.subr.mxu0 0.0
    %164 = vmatpush1.msra.mxu0 %v62
    %165 = vmatprep.subr.mxu0 0.0
    %166 = vmatpush1.msra.mxu0 %v63
    %167 = vmatprep.subr.mxu0 0.0
    %168 = vmatpush1.msra.mxu0 %v64
    %169 = vmatprep.subr.mxu0 0.0
    %170 = vmatpush1.msra.mxu0 %v65
    %171 = vmatprep.subr.mxu0 0.0
    %172 = vmatpush1.msra.mxu0 %v66
    %173 = vmatprep.subr.mxu0 0.0
    %174 = vmatpush1.msra.mxu0 %v67
    %175 = vmatprep.subr.mxu0 0.0
    %176 = vmatpush1.msra.mxu0 %v68
    %177 = vmatprep.subr.mxu0 0.0
    %178 = vmatpush1.msra.mxu0 %v69
    %179 = vmatprep.subr.mxu0 0.0
    %180 = vmatpush1.msra.mxu0 %v70
    %181 = vmatprep.subr.mxu0 0.0
    %182 = vmatpush1.msra.mxu0 %v71
    %183 = vmatprep.subr.mxu0 0.0
    %184 = vmatpush1.msra.mxu0 %v72
    %185 = vmatprep.subr.mxu0 0.0
    %186 = vmatpush1.msra.mxu0 %v73
    %187 = vmatprep.subr.mxu0 0.0
    %188 = vmatpush1.msra.mxu0 %v74
    %189 = vmatprep.subr.mxu0 0.0
    %190 = vmatpush1.msra.mxu0 %v75
    %191 = vmatprep.subr.mxu0 0.0
    %192 = vmatpush1.msra.mxu0 %v76
    %193 = vmatprep.subr.mxu0 0.0
    %194 = vmatpush1.msra.mxu0 %v77
    %195 = vmatprep.subr.mxu0 0.0
    %196 = vmatpush1.msra.mxu0 0.0
    %197 = vmatprep.subr.mxu0 0.0
    %198 = vmatpush1.msra.mxu0 0.0
    %199 = vmatprep.subr.mxu0 0.0
    %200 = vmatpush1.msra.mxu0 0.0
    %201 = vmatprep.subr.mxu0 0.0
    %202 = vmatpush1.msra.mxu0 0.0
    %203 = vmatprep.subr.mxu0 0.0
    %204 = vmatpush1.msra.mxu0 0.0
    %205 = vmatprep.subr.mxu0 0.0
    %206 = vmatpush1.msra.mxu0 0.0
    %207 = vmatprep.subr.mxu0 0.0
    %208 = vmatpush1.msra.mxu0 0.0
    %209 = vmatprep.subr.mxu0 0.0
    %210 = vmatpush1.msra.mxu0 0.0
    %211 = vmatprep.subr.mxu0 0.0
    %212 = vmatpush1.msra.mxu0 0.0
    %213 = vmatprep.subr.mxu0 0.0
    %214 = vmatpush1.msra.mxu0 0.0
    %215 = vmatprep.subr.mxu0 0.0
    %216 = vmatpush1.msra.mxu0 0.0
    %217 = vmatprep.subr.mxu0 0.0
    %218 = vmatpush1.msra.mxu0 0.0
    %219 = vmatprep.subr.mxu0 0.0
    %220 = vmatpush1.msra.mxu0 0.0
    %221 = vmatprep.subr.mxu0 0.0
    %222 = vmatpush1.msra.mxu0 0.0
    %223 = vmatprep.subr.mxu0 0.0
    %224 = vmatpush1.msra.mxu0 0.0
    %225 = vmatprep.subr.mxu0 0.0
    %226 = vmatpush1.msra.mxu0 0.0
    %227 = vmatprep.mubr.f32.mxu0 0.0
    %228 = vmatmul.mubr.f32.gmra.mrb[0].mxu0 %v161
    %v229 = vpop.f32.mrb[0].mxu0
    %v230 = vadd.f32 0.0, %v229
    %v231 = vpop.f32.mrb[0].mxu0
    %232 = vmatprep.mubr.f32.mxu0 0.0
    %233 = vmatmul.mubr.f32.gmra.mrb[0].mxu0 %v162
    %v234 = vpop.f32.mrb[0].mxu0
    %v235 = vadd.f32 0.0, %v234
    %v236 = vpop.f32.mrb[0].mxu0
    %237 = vdwg.mxu0
    %vm238 = vcmask 130048
    %v240 = vsel %vm238, %v79, 0
    %242 = vmatprep.subr.mxu0 0.0
    %243 = vmatpush1.msra.mxu0 %v153
    %244 = vmatprep.subr.mxu0 0.0
    %245 = vmatpush1.msra.mxu0 %v158
    %246 = vmatprep.subr.mxu0 0.0
    %247 = vmatpush1.msra.mxu0 0.0
    %248 = vmatprep.subr.mxu0 0.0
    %249 = vmatpush1.msra.mxu0 0.0
    %250 = vmatprep.subr.mxu0 0.0
    %251 = vmatpush1.msra.mxu0 0.0
    %252 = vmatprep.subr.mxu0 0.0
    %253 = vmatpush1.msra.mxu0 0.0
    %254 = vmatprep.subr.mxu0 0.0
    %255 = vmatpush1.msra.mxu0 0.0
    %256 = vmatprep.subr.mxu0 0.0
    %257 = vmatpush1.msra.mxu0 0.0
    %258 = vmatprep.subr.mxu0 0.0
    %259 = vmatpush1.msra.mxu0 0.0
    %260 = vmatprep.subr.mxu0 0.0
    %261 = vmatpush1.msra.mxu0 0.0
    %262 = vmatprep.subr.mxu0 0.0
    %263 = vmatpush1.msra.mxu0 0.0
    %264 = vmatprep.subr.mxu0 0.0
    %265 = vmatpush1.msra.mxu0 0.0
    %266 = vmatprep.subr.mxu0 0.0
    %267 = vmatpush1.msra.mxu0 0.0
    %268 = vmatprep.subr.mxu0 0.0
    %269 = vmatpush1.msra.mxu0 0.0
    %270 = vmatprep.subr.mxu0 0.0
    %271 = vmatpush1.msra.mxu0 0.0
    %272 = vmatprep.subr.mxu0 0.0
    %273 = vmatpush1.msra.mxu0 0.0
    %274 = vmatprep.subr.mxu0 0.0
    %275 = vmatpush1.msra.mxu0 0.0
    %276 = vmatprep.subr.mxu0 0.0
    %277 = vmatpush1.msra.mxu0 0.0
    %278 = vmatprep.subr.mxu0 0.0
    %279 = vmatpush1.msra.mxu0 0.0
    %280 = vmatprep.subr.mxu0 0.0
    %281 = vmatpush1.msra.mxu0 0.0
    %282 = vmatprep.subr.mxu0 0.0
    %283 = vmatpush1.msra.mxu0 0.0
    %284 = vmatprep.subr.mxu0 0.0
    %285 = vmatpush1.msra.mxu0 0.0
    %286 = vmatprep.subr.mxu0 0.0
    %287 = vmatpush1.msra.mxu0 0.0
    %288 = vmatprep.subr.mxu0 0.0
    %289 = vmatpush1.msra.mxu0 0.0
    %290 = vmatprep.subr.mxu0 0.0
    %291 = vmatpush1.msra.mxu0 0.0
    %292 = vmatprep.subr.mxu0 0.0
    %293 = vmatpush1.msra.mxu0 0.0
    %294 = vmatprep.subr.mxu0 0.0
    %295 = vmatpush1.msra.mxu0 0.0
    %296 = vmatprep.subr.mxu0 0.0
    %297 = vmatpush1.msra.mxu0 0.0
    %298 = vmatprep.subr.mxu0 0.0
    %299 = vmatpush1.msra.mxu0 0.0
    %300 = vmatprep.subr.mxu0 0.0
    %301 = vmatpush1.msra.mxu0 0.0
    %302 = vmatprep.subr.mxu0 0.0
    %303 = vmatpush1.msra.mxu0 0.0
    %304 = vmatprep.subr.mxu0 0.0
    %305 = vmatpush1.msra.mxu0 0.0
    %306 = vmatprep.mubr.f32.mxu0 0.0
    %307 = vmatmul.mubr.f32.gmra.mrb[0].mxu0 %v240
    %v308 = vpop.f32.mrb[0].mxu0
    %v309 = vadd.f32 0.0, %v308
    %v310 = vpop.f32.mrb[0].mxu0
    %311 = vdwg.mxu0
    %312 = vmatprep.subr.mxu0 0.0
    %313 = vmatpush1.msra.mxu0 %v230
    %314 = vmatprep.subr.mxu0 0.0
    %315 = vmatpush1.msra.mxu0 %v235
    %316 = vmatprep.subr.mxu0 0.0
    %317 = vmatpush1.msra.mxu0 0.0
    %318 = vmatprep.subr.mxu0 0.0
    %319 = vmatpush1.msra.mxu0 0.0
    %320 = vmatprep.subr.mxu0 0.0
    %321 = vmatpush1.msra.mxu0 0.0
    %322 = vmatprep.subr.mxu0 0.0
    %323 = vmatpush1.msra.mxu0 0.0
    %324 = vmatprep.subr.mxu0 0.0
    %325 = vmatpush1.msra.mxu0 0.0
    %326 = vmatprep.subr.mxu0 0.0
    %327 = vmatpush1.msra.mxu0 0.0
    %328 = vmatprep.subr.mxu0 0.0
    %329 = vmatpush1.msra.mxu0 0.0
    %330 = vmatprep.subr.mxu0 0.0
    %331 = vmatpush1.msra.mxu0 0.0
    %332 = vmatprep.subr.mxu0 0.0
    %333 = vmatpush1.msra.mxu0 0.0
    %334 = vmatprep.subr.mxu0 0.0
    %335 = vmatpush1.msra.mxu0 0.0
    %336 = vmatprep.subr.mxu0 0.0
    %337 = vmatpush1.msra.mxu0 0.0
    %338 = vmatprep.subr.mxu0 0.0
    %339 = vmatpush1.msra.mxu0 0.0
    %340 = vmatprep.subr.mxu0 0.0
    %341 = vmatpush1.msra.mxu0 0.0
    %342 = vmatprep.subr.mxu0 0.0
    %343 = vmatpush1.msra.mxu0 0.0
    %344 = vmatprep.subr.mxu0 0.0
    %345 = vmatpush1.msra.mxu0 0.0
    %346 = vmatprep.subr.mxu0 0.0
    %347 = vmatpush1.msra.mxu0 0.0
    %348 = vmatprep.subr.mxu0 0.0
    %349 = vmatpush1.msra.mxu0 0.0
    %350 = vmatprep.subr.mxu0 0.0
    %351 = vmatpush1.msra.mxu0 0.0
    %352 = vmatprep.subr.mxu0 0.0
    %353 = vmatpush1.msra.mxu0 0.0
    %354 = vmatprep.subr.mxu0 0.0
    %355 = vmatpush1.msra.mxu0 0.0
    %356 = vmatprep.subr.mxu0 0.0
    %357 = vmatpush1.msra.mxu0 0.0
    %358 = vmatprep.subr.mxu0 0.0
    %359 = vmatpush1.msra.mxu0 0.0
    %360 = vmatprep.subr.mxu0 0.0
    %361 = vmatpush1.msra.mxu0 0.0
    %362 = vmatprep.subr.mxu0 0.0
    %363 = vmatpush1.msra.mxu0 0.0
    %364 = vmatprep.subr.mxu0 0.0
    %365 = vmatpush1.msra.mxu0 0.0
    %366 = vmatprep.subr.mxu0 0.0
    %367 = vmatpush1.msra.mxu0 0.0
    %368 = vmatprep.subr.mxu0 0.0
    %369 = vmatpush1.msra.mxu0 0.0
    %370 = vmatprep.subr.mxu0 0.0
    %371 = vmatpush1.msra.mxu0 0.0
    %372 = vmatprep.subr.mxu0 0.0
    %373 = vmatpush1.msra.mxu0 0.0
    %374 = vmatprep.subr.mxu0 0.0
    %375 = vmatpush1.msra.mxu0 0.0
    %376 = vmatprep.mubr.f32.mxu0 0.0
    %377 = vmatmul.mubr.f32.gmra.mrb[0].mxu0 %v240
    %v378 = vpop.f32.mrb[0].mxu0
    %v379 = vadd.f32 0.0, %v378
    %v380 = vpop.f32.mrb[0].mxu0
    %381 = vdwg.mxu0
    %v382 = vmul.f32 %v309, 0.00390625
    %v383 = vmul.f32 %v379, 0.00390625
    %v384 = vmul.f32 %v382, %v382
    %v385 = vsub.f32 %v383, %v384
    %v386 = vmax.f32 %v385, 0.0
    %v387 = vadd.f32 %v386, 1e-06
    %v388 = vrsqrt.pop %v387
    %vm389 = vcmask 31744
    %v391 = vsel %vm389, %v80, 0
    %v394 = vsel %vm389, %v81, 0
    %vm396 = vcmask 1043456
    %v398 = vsel %vm396, %v382, 0
    %400 = vmatprep.subr.mxu0 0.0
    %401 = vmatpush1.msra.mxu0 %v398
    %402 = vmatprep.subr.mxu0 0.0
    %403 = vmatpush1.msra.mxu0 0.0
    %404 = vmatprep.subr.mxu0 0.0
    %405 = vmatpush1.msra.mxu0 0.0
    %406 = vmatprep.subr.mxu0 0.0
    %407 = vmatpush1.msra.mxu0 0.0
    %408 = vmatprep.subr.mxu0 0.0
    %409 = vmatpush1.msra.mxu0 0.0
    %410 = vmatprep.subr.mxu0 0.0
    %411 = vmatpush1.msra.mxu0 0.0
    %412 = vmatprep.subr.mxu0 0.0
    %413 = vmatpush1.msra.mxu0 0.0
    %414 = vmatprep.subr.mxu0 0.0
    %415 = vmatpush1.msra.mxu0 0.0
    %416 = vmatprep.subr.mxu0 0.0
    %417 = vmatpush1.msra.mxu0 0.0
    %418 = vmatprep.subr.mxu0 0.0
    %419 = vmatpush1.msra.mxu0 0.0
    %420 = vmatprep.subr.mxu0 0.0
    %421 = vmatpush1.msra.mxu0 0.0
    %422 = vmatprep.subr.mxu0 0.0
    %423 = vmatpush1.msra.mxu0 0.0
    %424 = vmatprep.subr.mxu0 0.0
    %425 = vmatpush1.msra.mxu0 0.0
    %426 = vmatprep.subr.mxu0 0.0
    %427 = vmatpush1.msra.mxu0 0.0
    %428 = vmatprep.subr.mxu0 0.0
    %429 = vmatpush1.msra.mxu0 0.0
    %430 = vmatprep.subr.mxu0 0.0
    %431 = vmatpush1.msra.mxu0 0.0
    %432 = vmatprep.subr.mxu0 0.0
    %433 = vmatpush1.msra.mxu0 0.0
    %434 = vmatprep.subr.mxu0 0.0
    %435 = vmatpush1.msra.mxu0 0.0
    %436 = vmatprep.subr.mxu0 0.0
    %437 = vmatpush1.msra.mxu0 0.0
    %438 = vmatprep.subr.mxu0 0.0
    %439 = vmatpush1.msra.mxu0 0.0
    %440 = vmatprep.subr.mxu0 0.0
    %441 = vmatpush1.msra.mxu0 0.0
    %442 = vmatprep.subr.mxu0 0.0
    %443 = vmatpush1.msra.mxu0 0.0
    %444 = vmatprep.subr.mxu0 0.0
    %445 = vmatpush1.msra.mxu0 0.0
    %446 = vmatprep.subr.mxu0 0.0
    %447 = vmatpush1.msra.mxu0 0.0
    %448 = vmatprep.subr.mxu0 0.0
    %449 = vmatpush1.msra.mxu0 0.0
    %450 = vmatprep.subr.mxu0 0.0
    %451 = vmatpush1.msra.mxu0 0.0
    %452 = vmatprep.subr.mxu0 0.0
    %453 = vmatpush1.msra.mxu0 0.0
    %454 = vmatprep.subr.mxu0 0.0
    %455 = vmatpush1.msra.mxu0 0.0
    %456 = vmatprep.subr.mxu0 0.0
    %457 = vmatpush1.msra.mxu0 0.0
    %458 = vmatprep.subr.mxu0 0.0
    %459 = vmatpush1.msra.mxu0 0.0
    %460 = vmatprep.subr.mxu0 0.0
    %461 = vmatpush1.msra.mxu0 0.0
    %462 = vmatprep.subr.mxu0 0.0
    %463 = vmatpush1.msra.mxu0 0.0
    %464 = vmatprep.mubr.f32.mxu0 0.0
    %465 = vmatmul.mubr.f32.gmra.mrb[0].mxu0 %v391
    %v466 = vpop.f32.mrb[0].mxu0
    %v467 = vadd.f32 0.0, %v466
    %v468 = vpop.f32.mrb[0].mxu0
    %469 = vmatprep.mubr.f32.mxu0 0.0
    %470 = vmatmul.mubr.f32.gmra.mrb[0].mxu0 %v394
    %v471 = vpop.f32.mrb[0].mxu0
    %v472 = vadd.f32 0.0, %v471
    %v473 = vpop.f32.mrb[0].mxu0
    %474 = vdwg.mxu0
    %vm475 = vcmask 15360
    %v477 = vsel %vm475, %v467, 0
    %v480 = vsel %vm475, %v472, 0
    %vm482 = vcmask 1041408
    %v484 = vsel %vm482, %v78, 0
    %486 = vmatprep.subr.mxu0 0.0
    %487 = vmatpush1.msra.mxu0 %v484
    %488 = vmatprep.subr.mxu0 0.0
    %489 = vmatpush1.msra.mxu0 0.0
    %490 = vmatprep.subr.mxu0 0.0
    %491 = vmatpush1.msra.mxu0 0.0
    %492 = vmatprep.subr.mxu0 0.0
    %493 = vmatpush1.msra.mxu0 0.0
    %494 = vmatprep.subr.mxu0 0.0
    %495 = vmatpush1.msra.mxu0 0.0
    %496 = vmatprep.subr.mxu0 0.0
    %497 = vmatpush1.msra.mxu0 0.0
    %498 = vmatprep.subr.mxu0 0.0
    %499 = vmatpush1.msra.mxu0 0.0
    %500 = vmatprep.subr.mxu0 0.0
    %501 = vmatpush1.msra.mxu0 0.0
    %502 = vmatprep.subr.mxu0 0.0
    %503 = vmatpush1.msra.mxu0 0.0
    %504 = vmatprep.subr.mxu0 0.0
    %505 = vmatpush1.msra.mxu0 0.0
    %506 = vmatprep.subr.mxu0 0.0
    %507 = vmatpush1.msra.mxu0 0.0
    %508 = vmatprep.subr.mxu0 0.0
    %509 = vmatpush1.msra.mxu0 0.0
    %510 = vmatprep.subr.mxu0 0.0
    %511 = vmatpush1.msra.mxu0 0.0
    %512 = vmatprep.subr.mxu0 0.0
    %513 = vmatpush1.msra.mxu0 0.0
    %514 = vmatprep.subr.mxu0 0.0
    %515 = vmatpush1.msra.mxu0 0.0
    %516 = vmatprep.subr.mxu0 0.0
    %517 = vmatpush1.msra.mxu0 0.0
    %518 = vmatprep.subr.mxu0 0.0
    %519 = vmatpush1.msra.mxu0 0.0
    %520 = vmatprep.subr.mxu0 0.0
    %521 = vmatpush1.msra.mxu0 0.0
    %522 = vmatprep.subr.mxu0 0.0
    %523 = vmatpush1.msra.mxu0 0.0
    %524 = vmatprep.subr.mxu0 0.0
    %525 = vmatpush1.msra.mxu0 0.0
    %526 = vmatprep.subr.mxu0 0.0
    %527 = vmatpush1.msra.mxu0 0.0
    %528 = vmatprep.subr.mxu0 0.0
    %529 = vmatpush1.msra.mxu0 0.0
    %530 = vmatprep.subr.mxu0 0.0
    %531 = vmatpush1.msra.mxu0 0.0
    %532 = vmatprep.subr.mxu0 0.0
    %533 = vmatpush1.msra.mxu0 0.0
    %534 = vmatprep.subr.mxu0 0.0
    %535 = vmatpush1.msra.mxu0 0.0
    %536 = vmatprep.subr.mxu0 0.0
    %537 = vmatpush1.msra.mxu0 0.0
    %538 = vmatprep.subr.mxu0 0.0
    %539 = vmatpush1.msra.mxu0 0.0
    %540 = vmatprep.subr.mxu0 0.0
    %541 = vmatpush1.msra.mxu0 0.0
    %542 = vmatprep.subr.mxu0 0.0
    %543 = vmatpush1.msra.mxu0 0.0
    %544 = vmatprep.subr.mxu0 0.0
    %545 = vmatpush1.msra.mxu0 0.0
    %546 = vmatprep.subr.mxu0 0.0
    %547 = vmatpush1.msra.mxu0 0.0
    %548 = vmatprep.subr.mxu0 0.0
    %549 = vmatpush1.msra.mxu0 0.0
    %550 = vmatprep.mubr.f32.mxu0 0.0
    %551 = vmatmul.mubr.f32.gmra.mrb[0].mxu0 %v477
    %v552 = vpop.f32.mrb[0].mxu0
    %v553 = vadd.f32 0.0, %v552
    %v554 = vpop.f32.mrb[0].mxu0
    %555 = vmatprep.mubr.f32.mxu0 0.0
    %556 = vmatmul.mubr.f32.gmra.mrb[0].mxu0 %v480
    %v557 = vpop.f32.mrb[0].mxu0
    %v558 = vadd.f32 0.0, %v557
    %v559 = vpop.f32.mrb[0].mxu0
    %560 = vdwg.mxu0
    %v562 = vsel %vm396, %v388, 0
    %564 = vmatprep.subr.mxu0 0.0
    %565 = vmatpush1.msra.mxu0 %v562
    %566 = vmatprep.subr.mxu0 0.0
    %567 = vmatpush1.msra.mxu0 0.0
    %568 = vmatprep.subr.mxu0 0.0
    %569 = vmatpush1.msra.mxu0 0.0
    %570 = vmatprep.subr.mxu0 0.0
    %571 = vmatpush1.msra.mxu0 0.0
    %572 = vmatprep.subr.mxu0 0.0
    %573 = vmatpush1.msra.mxu0 0.0
    %574 = vmatprep.subr.mxu0 0.0
    %575 = vmatpush1.msra.mxu0 0.0
    %576 = vmatprep.subr.mxu0 0.0
    %577 = vmatpush1.msra.mxu0 0.0
    %578 = vmatprep.subr.mxu0 0.0
    %579 = vmatpush1.msra.mxu0 0.0
    %580 = vmatprep.subr.mxu0 0.0
    %581 = vmatpush1.msra.mxu0 0.0
    %582 = vmatprep.subr.mxu0 0.0
    %583 = vmatpush1.msra.mxu0 0.0
    %584 = vmatprep.subr.mxu0 0.0
    %585 = vmatpush1.msra.mxu0 0.0
    %586 = vmatprep.subr.mxu0 0.0
    %587 = vmatpush1.msra.mxu0 0.0
    %588 = vmatprep.subr.mxu0 0.0
    %589 = vmatpush1.msra.mxu0 0.0
    %590 = vmatprep.subr.mxu0 0.0
    %591 = vmatpush1.msra.mxu0 0.0
    %592 = vmatprep.subr.mxu0 0.0
    %593 = vmatpush1.msra.mxu0 0.0
    %594 = vmatprep.subr.mxu0 0.0
    %595 = vmatpush1.msra.mxu0 0.0
    %596 = vmatprep.subr.mxu0 0.0
    %597 = vmatpush1.msra.mxu0 0.0
    %598 = vmatprep.subr.mxu0 0.0
    %599 = vmatpush1.msra.mxu0 0.0
    %600 = vmatprep.subr.mxu0 0.0
    %601 = vmatpush1.msra.mxu0 0.0
    %602 = vmatprep.subr.mxu0 0.0
    %603 = vmatpush1.msra.mxu0 0.0
    %604 = vmatprep.subr.mxu0 0.0
    %605 = vmatpush1.msra.mxu0 0.0
    %606 = vmatprep.subr.mxu0 0.0
    %607 = vmatpush1.msra.mxu0 0.0
    %608 = vmatprep.subr.mxu0 0.0
    %609 = vmatpush1.msra.mxu0 0.0
    %610 = vmatprep.subr.mxu0 0.0
    %611 = vmatpush1.msra.mxu0 0.0
    %612 = vmatprep.subr.mxu0 0.0
    %613 = vmatpush1.msra.mxu0 0.0
    %614 = vmatprep.subr.mxu0 0.0
    %615 = vmatpush1.msra.mxu0 0.0
    %616 = vmatprep.subr.mxu0 0.0
    %617 = vmatpush1.msra.mxu0 0.0
    %618 = vmatprep.subr.mxu0 0.0
    %619 = vmatpush1.msra.mxu0 0.0
    %620 = vmatprep.subr.mxu0 0.0
    %621 = vmatpush1.msra.mxu0 0.0
    %622 = vmatprep.subr.mxu0 0.0
    %623 = vmatpush1.msra.mxu0 0.0
    %624 = vmatprep.subr.mxu0 0.0
    %625 = vmatpush1.msra.mxu0 0.0
    %626 = vmatprep.subr.mxu0 0.0
    %627 = vmatpush1.msra.mxu0 0.0
    %628 = vmatprep.mubr.f32.mxu0 0.0
    %629 = vmatmul.mubr.f32.gmra.mrb[0].mxu0 %v391
    %v630 = vpop.f32.mrb[0].mxu0
    %v631 = vadd.f32 0.0, %v630
    %v632 = vpop.f32.mrb[0].mxu0
    %633 = vmatprep.mubr.f32.mxu0 0.0
    %634 = vmatmul.mubr.f32.gmra.mrb[0].mxu0 %v394
    %v635 = vpop.f32.mrb[0].mxu0
    %v636 = vadd.f32 0.0, %v635
    %v637 = vpop.f32.mrb[0].mxu0
    %638 = vdwg.mxu0
    %v640 = vsel %vm475, %v631, 0
    %v643 = vsel %vm475, %v636, 0
    %645 = vmatprep.subr.mxu0 0.0
    %646 = vmatpush1.msra.mxu0 %v484
    %647 = vmatprep.subr.mxu0 0.0
    %648 = vmatpush1.msra.mxu0 0.0
    %649 = vmatprep.subr.mxu0 0.0
    %650 = vmatpush1.msra.mxu0 0.0
    %651 = vmatprep.subr.mxu0 0.0
    %652 = vmatpush1.msra.mxu0 0.0
    %653 = vmatprep.subr.mxu0 0.0
    %654 = vmatpush1.msra.mxu0 0.0
    %655 = vmatprep.subr.mxu0 0.0
    %656 = vmatpush1.msra.mxu0 0.0
    %657 = vmatprep.subr.mxu0 0.0
    %658 = vmatpush1.msra.mxu0 0.0
    %659 = vmatprep.subr.mxu0 0.0
    %660 = vmatpush1.msra.mxu0 0.0
    %661 = vmatprep.subr.mxu0 0.0
    %662 = vmatpush1.msra.mxu0 0.0
    %663 = vmatprep.subr.mxu0 0.0
    %664 = vmatpush1.msra.mxu0 0.0
    %665 = vmatprep.subr.mxu0 0.0
    %666 = vmatpush1.msra.mxu0 0.0
    %667 = vmatprep.subr.mxu0 0.0
    %668 = vmatpush1.msra.mxu0 0.0
    %669 = vmatprep.subr.mxu0 0.0
    %670 = vmatpush1.msra.mxu0 0.0
    %671 = vmatprep.subr.mxu0 0.0
    %672 = vmatpush1.msra.mxu0 0.0
    %673 = vmatprep.subr.mxu0 0.0
    %674 = vmatpush1.msra.mxu0 0.0
    %675 = vmatprep.subr.mxu0 0.0
    %676 = vmatpush1.msra.mxu0 0.0
    %677 = vmatprep.subr.mxu0 0.0
    %678 = vmatpush1.msra.mxu0 0.0
    %679 = vmatprep.subr.mxu0 0.0
    %680 = vmatpush1.msra.mxu0 0.0
    %681 = vmatprep.subr.mxu0 0.0
    %682 = vmatpush1.msra.mxu0 0.0
    %683 = vmatprep.subr.mxu0 0.0
    %684 = vmatpush1.msra.mxu0 0.0
    %685 = vmatprep.subr.mxu0 0.0
    %686 = vmatpush1.msra.mxu0 0.0
    %687 = vmatprep.subr.mxu0 0.0
    %688 = vmatpush1.msra.mxu0 0.0
    %689 = vmatprep.subr.mxu0 0.0
    %690 = vmatpush1.msra.mxu0 0.0
    %691 = vmatprep.subr.mxu0 0.0
    %692 = vmatpush1.msra.mxu0 0.0
    %693 = vmatprep.subr.mxu0 0.0
    %694 = vmatpush1.msra.mxu0 0.0
    %695 = vmatprep.subr.mxu0 0.0
    %696 = vmatpush1.msra.mxu0 0.0
    %697 = vmatprep.subr.mxu0 0.0
    %698 = vmatpush1.msra.mxu0 0.0
    %699 = vmatprep.subr.mxu0 0.0
    %700 = vmatpush1.msra.mxu0 0.0
    %701 = vmatprep.subr.mxu0 0.0
    %702 = vmatpush1.msra.mxu0 0.0
    %703 = vmatprep.subr.mxu0 0.0
    %704 = vmatpush1.msra.mxu0 0.0
    %705 = vmatprep.subr.mxu0 0.0
    %706 = vmatpush1.msra.mxu0 0.0
    %707 = vmatprep.subr.mxu0 0.0
    %708 = vmatpush1.msra.mxu0 0.0
    %709 = vmatprep.mubr.f32.mxu0 0.0
    %710 = vmatmul.mubr.f32.gmra.mrb[0].mxu0 %v640
    %v711 = vpop.f32.mrb[0].mxu0
    %v712 = vadd.f32 0.0, %v711
    %v713 = vpop.f32.mrb[0].mxu0
    %714 = vmatprep.mubr.f32.mxu0 0.0
    %715 = vmatmul.mubr.f32.gmra.mrb[0].mxu0 %v643
    %v716 = vpop.f32.mrb[0].mxu0
    %v717 = vadd.f32 0.0, %v716
    %v718 = vpop.f32.mrb[0].mxu0
    %719 = vdwg.mxu0
    %v720 = vsub.f32 %v60, %v553
    %v721 = vsub.f32 %v61, %v558
    %v722 = vmul.f32 %v720, %v712
    %v723 = vmul.f32 %v721, %v717
    %725 = vset.pattern.permute.xlu0 0
    %726 = vperm.xlu0 %725, %v82
    %v727 = vpop.permute.xlu0 %726
    %730 = vset.pattern.permute.xlu0 0
    %731 = vperm.xlu0 %730, %v83
    %v732 = vpop.permute.xlu0 %731
    %v734 = vmul.f32 %v722, %v727
    %v735 = vmul.f32 %v723, %v732
    %737 = vset.pattern.permute.xlu0 0
    %738 = vperm.xlu0 %737, %v84
    %v739 = vpop.permute.xlu0 %738
    %742 = vset.pattern.permute.xlu0 0
    %743 = vperm.xlu0 %742, %v85
    %v744 = vpop.permute.xlu0 %743
    %v746 = vadd.f32 %v734, %v739
    %v747 = vadd.f32 %v735, %v744
    %v748 = vxor.u32 %v746, 2147483648
    %v749 = vxor.u32 %v747, 2147483648
    %v750 = vmul.f32 %v748, 1.442695
    %v751 = vpow.pop %v750
    %v752 = vmul.f32 %v749, 1.442695
    %v753 = vpow.pop %v752
    %v754 = vadd.f32 %v751, 1.0
    %v755 = vadd.f32 %v753, 1.0
    %v756 = vrcp.pop %v754
    %v757 = vmul.f32 1.0, %v756
    %v758 = vrcp.pop %v755
    %v759 = vmul.f32 1.0, %v758
    %v760 = vmul.f32 %v746, %v757
    %v761 = vmul.f32 %v747, %v759
    %v762 = vld [vmem:[%s8] sm:$0xff]
    %v763 = vld [vmem:[%s8 + $0x8] sm:$0xff]
    %v764 = vld [vmem:[%s8 + $0x10] sm:$0xff]
    %v765 = vld [vmem:[%s8 + $0x18] sm:$0xff]
    %v766 = vld [vmem:[%s9] sm:$0xff]
    %v767 = vld [vmem:[%s9 + $0x8] sm:$0xff]
    %v768 = vld [vmem:[%s9 + $0x10] sm:$0xff]
    %v769 = vld [vmem:[%s9 + $0x18] sm:$0xff]
    %v770 = vlaneseq
    %v771 = vand.u32 %v770, 127
    %vm772 = vcmp.lt.s32.totalorder %v771, 0
    %v773 = vsub.s32 0, %v771
    %v774 = vsel %vm772, %v773, %v771
    %v775 = vshrl.u32 %v774, 6
    %v776 = vand.u32 %v774, 63
    %v777 = vsub.s32 0, %v776
    %v778 = vsel %vm772, %v777, %v776
    %vm779 = vcmp.ne.s32.totalorder %v778, 0
    %vm780 = vcmp.lt.s32.totalorder %v778, 0
    %vm781 = vmand %vm780, %vm779
    %v782 = vadd.s32 %v778, 64
    %v783 = vsel %vm781, %v782, %v778
    %vm784 = vcmp.eq.s32.totalorder %v783, 0
    %785 = vrot.lane.b32.xlu0 %v760, 1
    %v786 = vpop.permute.xlu0 %785
    %787 = vrot.lane.b32.xlu0 %v761, 1
    %v788 = vpop.permute.xlu0 %787
    %v789 = vsel %vm784, 0.0, %v786
    %v790 = vsel %vm784, 0.0, %v788
    %vm791 = vcmp.eq.s32.totalorder %v783, 63
    %792 = vrot.lane.b32.xlu0 %v760, 127
    %v793 = vpop.permute.xlu0 %792
    %794 = vrot.lane.b32.xlu0 %v761, 127
    %v795 = vpop.permute.xlu0 %794
    %v796 = vsel %vm791, 0.0, %v793
    %v797 = vsel %vm791, 0.0, %v795
    %799 = vset.pattern.permute.xlu0 0
    %800 = vperm.xlu0 %799, %v766
    %v801 = vpop.permute.xlu0 %800
    %804 = vset.pattern.permute.xlu0 0
    %805 = vperm.xlu0 %804, %v767
    %v806 = vpop.permute.xlu0 %805
    %809 = vset.pattern.permute.xlu0 0
    %810 = vperm.xlu0 %809, %v768
    %v811 = vpop.permute.xlu0 %810
    %814 = vset.pattern.permute.xlu0 0
    %815 = vperm.xlu0 %814, %v769
    %v816 = vpop.permute.xlu0 %815
    %vm818 = vcmask 392192
    %v820 = vsel %vm818, %v762, 0
    %v823 = vsel %vm818, %v763, 0
    %v826 = vsel %vm818, %v764, 0
    %v829 = vsel %vm818, %v765, 0
    %831 = vmatprep.subr.mxu0 0.0
    %832 = vmatpush1.msra.mxu0 %v789
    %833 = vmatprep.subr.mxu0 0.0
    %834 = vmatpush1.msra.mxu0 %v790
    %835 = vmatprep.subr.mxu0 0.0
    %836 = vmatpush1.msra.mxu0 %v760
    %837 = vmatprep.subr.mxu0 0.0
    %838 = vmatpush1.msra.mxu0 %v761
    %839 = vmatprep.subr.mxu0 0.0
    %840 = vmatpush1.msra.mxu0 %v796
    %841 = vmatprep.subr.mxu0 0.0
    %842 = vmatpush1.msra.mxu0 %v797
    %843 = vmatprep.subr.mxu0 0.0
    %844 = vmatpush1.msra.mxu0 0.0
    %845 = vmatprep.subr.mxu0 0.0
    %846 = vmatpush1.msra.mxu0 0.0
    %847 = vmatprep.subr.mxu0 0.0
    %848 = vmatpush1.msra.mxu0 0.0
    %849 = vmatprep.subr.mxu0 0.0
    %850 = vmatpush1.msra.mxu0 0.0
    %851 = vmatprep.subr.mxu0 0.0
    %852 = vmatpush1.msra.mxu0 0.0
    %853 = vmatprep.subr.mxu0 0.0
    %854 = vmatpush1.msra.mxu0 0.0
    %855 = vmatprep.subr.mxu0 0.0
    %856 = vmatpush1.msra.mxu0 0.0
    %857 = vmatprep.subr.mxu0 0.0
    %858 = vmatpush1.msra.mxu0 0.0
    %859 = vmatprep.subr.mxu0 0.0
    %860 = vmatpush1.msra.mxu0 0.0
    %861 = vmatprep.subr.mxu0 0.0
    %862 = vmatpush1.msra.mxu0 0.0
    %863 = vmatprep.subr.mxu0 0.0
    %864 = vmatpush1.msra.mxu0 0.0
    %865 = vmatprep.subr.mxu0 0.0
    %866 = vmatpush1.msra.mxu0 0.0
    %867 = vmatprep.subr.mxu0 0.0
    %868 = vmatpush1.msra.mxu0 0.0
    %869 = vmatprep.subr.mxu0 0.0
    %870 = vmatpush1.msra.mxu0 0.0
    %871 = vmatprep.subr.mxu0 0.0
    %872 = vmatpush1.msra.mxu0 0.0
    %873 = vmatprep.subr.mxu0 0.0
    %874 = vmatpush1.msra.mxu0 0.0
    %875 = vmatprep.subr.mxu0 0.0
    %876 = vmatpush1.msra.mxu0 0.0
    %877 = vmatprep.subr.mxu0 0.0
    %878 = vmatpush1.msra.mxu0 0.0
    %879 = vmatprep.subr.mxu0 0.0
    %880 = vmatpush1.msra.mxu0 0.0
    %881 = vmatprep.subr.mxu0 0.0
    %882 = vmatpush1.msra.mxu0 0.0
    %883 = vmatprep.subr.mxu0 0.0
    %884 = vmatpush1.msra.mxu0 0.0
    %885 = vmatprep.subr.mxu0 0.0
    %886 = vmatpush1.msra.mxu0 0.0
    %887 = vmatprep.subr.mxu0 0.0
    %888 = vmatpush1.msra.mxu0 0.0
    %889 = vmatprep.subr.mxu0 0.0
    %890 = vmatpush1.msra.mxu0 0.0
    %891 = vmatprep.subr.mxu0 0.0
    %892 = vmatpush1.msra.mxu0 0.0
    %893 = vmatprep.subr.mxu0 0.0
    %894 = vmatpush1.msra.mxu0 0.0
    %895 = vmatprep.mubr.f32.mxu0 0.0
    %896 = vmatmul.mubr.f32.gmra.mrb[0].mxu0 %v820
    %v897 = vpop.f32.mrb[0].mxu0
    %v898 = vadd.f32 %v801, %v897
    %v899 = vpop.f32.mrb[0].mxu0
    %900 = vmatprep.mubr.f32.mxu0 0.0
    %901 = vmatmul.mubr.f32.gmra.mrb[0].mxu0 %v823
    %v902 = vpop.f32.mrb[0].mxu0
    %v903 = vadd.f32 %v806, %v902
    %v904 = vpop.f32.mrb[0].mxu0
    %905 = vmatprep.mubr.f32.mxu0 0.0
    %906 = vmatmul.mubr.f32.gmra.mrb[0].mxu0 %v826
    %v907 = vpop.f32.mrb[0].mxu0
    %v908 = vadd.f32 %v811, %v907
    %v909 = vpop.f32.mrb[0].mxu0
    %910 = vmatprep.mubr.f32.mxu0 0.0
    %911 = vmatmul.mubr.f32.gmra.mrb[0].mxu0 %v829
    %v912 = vpop.f32.mrb[0].mxu0
    %v913 = vadd.f32 %v816, %v912
    %v914 = vpop.f32.mrb[0].mxu0
    %915 = vdwg.mxu0
    %v916 = vld [vmem:[%s3] sm:$0xff]
    %v917 = vld [vmem:[%s3 + $0x8] sm:$0xff]
    %v918 = vld [vmem:[%s3 + $0x10] sm:$0xff]
    %v919 = vld [vmem:[%s3 + $0x18] sm:$0xff]
    %v921 = vsel %vm475, %v916, 0
    %v924 = vsel %vm475, %v917, 0
    %v927 = vsel %vm475, %v918, 0
    %v930 = vsel %vm475, %v919, 0
    %932 = vmatprep.subr.mxu0 0.0
    %933 = vmatpush1.msra.mxu0 %v484
    %934 = vmatprep.subr.mxu0 0.0
    %935 = vmatpush1.msra.mxu0 0.0
    %936 = vmatprep.subr.mxu0 0.0
    %937 = vmatpush1.msra.mxu0 0.0
    %938 = vmatprep.subr.mxu0 0.0
    %939 = vmatpush1.msra.mxu0 0.0
    %940 = vmatprep.subr.mxu0 0.0
    %941 = vmatpush1.msra.mxu0 0.0
    %942 = vmatprep.subr.mxu0 0.0
    %943 = vmatpush1.msra.mxu0 0.0
    %944 = vmatprep.subr.mxu0 0.0
    %945 = vmatpush1.msra.mxu0 0.0
    %946 = vmatprep.subr.mxu0 0.0
    %947 = vmatpush1.msra.mxu0 0.0
    %948 = vmatprep.subr.mxu0 0.0
    %949 = vmatpush1.msra.mxu0 0.0
    %950 = vmatprep.subr.mxu0 0.0
    %951 = vmatpush1.msra.mxu0 0.0
    %952 = vmatprep.subr.mxu0 0.0
    %953 = vmatpush1.msra.mxu0 0.0
    %954 = vmatprep.subr.mxu0 0.0
    %955 = vmatpush1.msra.mxu0 0.0
    %956 = vmatprep.subr.mxu0 0.0
    %957 = vmatpush1.msra.mxu0 0.0
    %958 = vmatprep.subr.mxu0 0.0
    %959 = vmatpush1.msra.mxu0 0.0
    %960 = vmatprep.subr.mxu0 0.0
    %961 = vmatpush1.msra.mxu0 0.0
    %962 = vmatprep.subr.mxu0 0.0
    %963 = vmatpush1.msra.mxu0 0.0
    %964 = vmatprep.subr.mxu0 0.0
    %965 = vmatpush1.msra.mxu0 0.0
    %966 = vmatprep.subr.mxu0 0.0
    %967 = vmatpush1.msra.mxu0 0.0
    %968 = vmatprep.subr.mxu0 0.0
    %969 = vmatpush1.msra.mxu0 0.0
    %970 = vmatprep.subr.mxu0 0.0
    %971 = vmatpush1.msra.mxu0 0.0
    %972 = vmatprep.subr.mxu0 0.0
    %973 = vmatpush1.msra.mxu0 0.0
    %974 = vmatprep.subr.mxu0 0.0
    %975 = vmatpush1.msra.mxu0 0.0
    %976 = vmatprep.subr.mxu0 0.0
    %977 = vmatpush1.msra.mxu0 0.0
    %978 = vmatprep.subr.mxu0 0.0
    %979 = vmatpush1.msra.mxu0 0.0
    %980 = vmatprep.subr.mxu0 0.0
    %981 = vmatpush1.msra.mxu0 0.0
    %982 = vmatprep.subr.mxu0 0.0
    %983 = vmatpush1.msra.mxu0 0.0
    %984 = vmatprep.subr.mxu0 0.0
    %985 = vmatpush1.msra.mxu0 0.0
    %986 = vmatprep.subr.mxu0 0.0
    %987 = vmatpush1.msra.mxu0 0.0
    %988 = vmatprep.subr.mxu0 0.0
    %989 = vmatpush1.msra.mxu0 0.0
    %990 = vmatprep.subr.mxu0 0.0
    %991 = vmatpush1.msra.mxu0 0.0
    %992 = vmatprep.subr.mxu0 0.0
    %993 = vmatpush1.msra.mxu0 0.0
    %994 = vmatprep.subr.mxu0 0.0
    %995 = vmatpush1.msra.mxu0 0.0
    %996 = vmatprep.mubr.f32.mxu0 0.0
    %997 = vmatmul.mubr.f32.gmra.mrb[0].mxu0 %v921
    %v998 = vpop.f32.mrb[0].mxu0
    %v999 = vadd.f32 0.0, %v998
    %v1000 = vpop.f32.mrb[0].mxu0
    %1001 = vmatprep.mubr.f32.mxu0 0.0
    %1002 = vmatmul.mubr.f32.gmra.mrb[0].mxu0 %v924
    %v1003 = vpop.f32.mrb[0].mxu0
    %v1004 = vadd.f32 0.0, %v1003
    %v1005 = vpop.f32.mrb[0].mxu0
    %1006 = vmatprep.mubr.f32.mxu0 0.0
    %1007 = vmatmul.mubr.f32.gmra.mrb[0].mxu0 %v927
    %v1008 = vpop.f32.mrb[0].mxu0
    %v1009 = vadd.f32 0.0, %v1008
    %v1010 = vpop.f32.mrb[0].mxu0
    %1011 = vmatprep.mubr.f32.mxu0 0.0
    %1012 = vmatmul.mubr.f32.gmra.mrb[0].mxu0 %v930
    %v1013 = vpop.f32.mrb[0].mxu0
    %v1014 = vadd.f32 0.0, %v1013
    %v1015 = vpop.f32.mrb[0].mxu0
    %1016 = vdwg.mxu0
    %v1017 = vadd.f32 %v898, %v999
    %v1018 = vadd.f32 %v903, %v1004
    %v1019 = vadd.f32 %v908, %v1009
    %v1020 = vadd.f32 %v913, %v1014
    %v1021 = vld [vmem:[%s12] sm:$0xf]
    %v1022 = vld [vmem:[%s13] sm:$0xff]
    %v1023 = vld [vmem:[%s13 + $0x8] sm:$0xff]
    %v1024 = vld [vmem:[%s13 + $0x10] sm:$0xff]
    %v1025 = vld [vmem:[%s13 + $0x18] sm:$0xff]
    %v1026 = vld [vmem:[%s10] sm:$0xff]
    %v1027 = vld [vmem:[%s10 + $0x8] sm:$0xff]
    %v1028 = vld [vmem:[%s10 + $0x10] sm:$0xff]
    %v1029 = vld [vmem:[%s10 + $0x18] sm:$0xff]
    %v1030 = vld [vmem:[%s11] sm:$0xff]
    %v1031 = vld [vmem:[%s11 + $0x8] sm:$0xff]
    %v1032 = vld [vmem:[%s11 + $0x10] sm:$0xff]
    %v1033 = vld [vmem:[%s11 + $0x18] sm:$0xff]
    %1034 = vmatprep.subr.mxu0 0.0
    %1035 = vmatpush1.msra.mxu0 %v62
    %1036 = vmatprep.subr.mxu0 0.0
    %1037 = vmatpush1.msra.mxu0 %v63
    %1038 = vmatprep.subr.mxu0 0.0
    %1039 = vmatpush1.msra.mxu0 %v64
    %1040 = vmatprep.subr.mxu0 0.0
    %1041 = vmatpush1.msra.mxu0 %v65
    %1042 = vmatprep.subr.mxu0 0.0
    %1043 = vmatpush1.msra.mxu0 %v66
    %1044 = vmatprep.subr.mxu0 0.0
    %1045 = vmatpush1.msra.mxu0 %v67
    %1046 = vmatprep.subr.mxu0 0.0
    %1047 = vmatpush1.msra.mxu0 %v68
    %1048 = vmatprep.subr.mxu0 0.0
    %1049 = vmatpush1.msra.mxu0 %v69
    %1050 = vmatprep.subr.mxu0 0.0
    %1051 = vmatpush1.msra.mxu0 %v70
    %1052 = vmatprep.subr.mxu0 0.0
    %1053 = vmatpush1.msra.mxu0 %v71
    %1054 = vmatprep.subr.mxu0 0.0
    %1055 = vmatpush1.msra.mxu0 %v72
    %1056 = vmatprep.subr.mxu0 0.0
    %1057 = vmatpush1.msra.mxu0 %v73
    %1058 = vmatprep.subr.mxu0 0.0
    %1059 = vmatpush1.msra.mxu0 %v74
    %1060 = vmatprep.subr.mxu0 0.0
    %1061 = vmatpush1.msra.mxu0 %v75
    %1062 = vmatprep.subr.mxu0 0.0
    %1063 = vmatpush1.msra.mxu0 %v76
    %1064 = vmatprep.subr.mxu0 0.0
    %1065 = vmatpush1.msra.mxu0 %v77
    %1066 = vmatprep.subr.mxu0 0.0
    %1067 = vmatpush1.msra.mxu0 0.0
    %1068 = vmatprep.subr.mxu0 0.0
    %1069 = vmatpush1.msra.mxu0 0.0
    %1070 = vmatprep.subr.mxu0 0.0
    %1071 = vmatpush1.msra.mxu0 0.0
    %1072 = vmatprep.subr.mxu0 0.0
    %1073 = vmatpush1.msra.mxu0 0.0
    %1074 = vmatprep.subr.mxu0 0.0
    %1075 = vmatpush1.msra.mxu0 0.0
    %1076 = vmatprep.subr.mxu0 0.0
    %1077 = vmatpush1.msra.mxu0 0.0
    %1078 = vmatprep.subr.mxu0 0.0
    %1079 = vmatpush1.msra.mxu0 0.0
    %1080 = vmatprep.subr.mxu0 0.0
    %1081 = vmatpush1.msra.mxu0 0.0
    %1082 = vmatprep.subr.mxu0 0.0
    %1083 = vmatpush1.msra.mxu0 0.0
    %1084 = vmatprep.subr.mxu0 0.0
    %1085 = vmatpush1.msra.mxu0 0.0
    %1086 = vmatprep.subr.mxu0 0.0
    %1087 = vmatpush1.msra.mxu0 0.0
    %1088 = vmatprep.subr.mxu0 0.0
    %1089 = vmatpush1.msra.mxu0 0.0
    %1090 = vmatprep.subr.mxu0 0.0
    %1091 = vmatpush1.msra.mxu0 0.0
    %1092 = vmatprep.subr.mxu0 0.0
    %1093 = vmatpush1.msra.mxu0 0.0
    %1094 = vmatprep.subr.mxu0 0.0
    %1095 = vmatpush1.msra.mxu0 0.0
    %1096 = vmatprep.subr.mxu0 0.0
    %1097 = vmatpush1.msra.mxu0 0.0
    %1098 = vmatprep.mubr.f32.mxu0 0.0
    %1099 = vmatmul.mubr.f32.gmra.mrb[0].mxu0 %v1017
    %v1100 = vpop.f32.mrb[0].mxu0
    %v1101 = vadd.f32 0.0, %v1100
    %v1102 = vpop.f32.mrb[0].mxu0
    %1103 = vmatprep.mubr.f32.mxu0 0.0
    %1104 = vmatmul.mubr.f32.gmra.mrb[0].mxu0 %v1018
    %v1105 = vpop.f32.mrb[0].mxu0
    %v1106 = vadd.f32 0.0, %v1105
    %v1107 = vpop.f32.mrb[0].mxu0
    %1108 = vmatprep.mubr.f32.mxu0 0.0
    %1109 = vmatmul.mubr.f32.gmra.mrb[0].mxu0 %v1019
    %v1110 = vpop.f32.mrb[0].mxu0
    %v1111 = vadd.f32 0.0, %v1110
    %v1112 = vpop.f32.mrb[0].mxu0
    %1113 = vmatprep.mubr.f32.mxu0 0.0
    %1114 = vmatmul.mubr.f32.gmra.mrb[0].mxu0 %v1020
    %v1115 = vpop.f32.mrb[0].mxu0
    %v1116 = vadd.f32 0.0, %v1115
    %v1117 = vpop.f32.mrb[0].mxu0
    %1118 = vdwg.mxu0
    %v1119 = vmul.f32 %v1017, %v1017
    %v1120 = vmul.f32 %v1018, %v1018
    %v1121 = vmul.f32 %v1019, %v1019
    %v1122 = vmul.f32 %v1020, %v1020
    %1123 = vmatprep.subr.mxu0 0.0
    %1124 = vmatpush1.msra.mxu0 %v62
    %1125 = vmatprep.subr.mxu0 0.0
    %1126 = vmatpush1.msra.mxu0 %v63
    %1127 = vmatprep.subr.mxu0 0.0
    %1128 = vmatpush1.msra.mxu0 %v64
    %1129 = vmatprep.subr.mxu0 0.0
    %1130 = vmatpush1.msra.mxu0 %v65
    %1131 = vmatprep.subr.mxu0 0.0
    %1132 = vmatpush1.msra.mxu0 %v66
    %1133 = vmatprep.subr.mxu0 0.0
    %1134 = vmatpush1.msra.mxu0 %v67
    %1135 = vmatprep.subr.mxu0 0.0
    %1136 = vmatpush1.msra.mxu0 %v68
    %1137 = vmatprep.subr.mxu0 0.0
    %1138 = vmatpush1.msra.mxu0 %v69
    %1139 = vmatprep.subr.mxu0 0.0
    %1140 = vmatpush1.msra.mxu0 %v70
    %1141 = vmatprep.subr.mxu0 0.0
    %1142 = vmatpush1.msra.mxu0 %v71
    %1143 = vmatprep.subr.mxu0 0.0
    %1144 = vmatpush1.msra.mxu0 %v72
    %1145 = vmatprep.subr.mxu0 0.0
    %1146 = vmatpush1.msra.mxu0 %v73
    %1147 = vmatprep.subr.mxu0 0.0
    %1148 = vmatpush1.msra.mxu0 %v74
    %1149 = vmatprep.subr.mxu0 0.0
    %1150 = vmatpush1.msra.mxu0 %v75
    %1151 = vmatprep.subr.mxu0 0.0
    %1152 = vmatpush1.msra.mxu0 %v76
    %1153 = vmatprep.subr.mxu0 0.0
    %1154 = vmatpush1.msra.mxu0 %v77
    %1155 = vmatprep.subr.mxu0 0.0
    %1156 = vmatpush1.msra.mxu0 0.0
    %1157 = vmatprep.subr.mxu0 0.0
    %1158 = vmatpush1.msra.mxu0 0.0
    %1159 = vmatprep.subr.mxu0 0.0
    %1160 = vmatpush1.msra.mxu0 0.0
    %1161 = vmatprep.subr.mxu0 0.0
    %1162 = vmatpush1.msra.mxu0 0.0
    %1163 = vmatprep.subr.mxu0 0.0
    %1164 = vmatpush1.msra.mxu0 0.0
    %1165 = vmatprep.subr.mxu0 0.0
    %1166 = vmatpush1.msra.mxu0 0.0
    %1167 = vmatprep.subr.mxu0 0.0
    %1168 = vmatpush1.msra.mxu0 0.0
    %1169 = vmatprep.subr.mxu0 0.0
    %1170 = vmatpush1.msra.mxu0 0.0
    %1171 = vmatprep.subr.mxu0 0.0
    %1172 = vmatpush1.msra.mxu0 0.0
    %1173 = vmatprep.subr.mxu0 0.0
    %1174 = vmatpush1.msra.mxu0 0.0
    %1175 = vmatprep.subr.mxu0 0.0
    %1176 = vmatpush1.msra.mxu0 0.0
    %1177 = vmatprep.subr.mxu0 0.0
    %1178 = vmatpush1.msra.mxu0 0.0
    %1179 = vmatprep.subr.mxu0 0.0
    %1180 = vmatpush1.msra.mxu0 0.0
    %1181 = vmatprep.subr.mxu0 0.0
    %1182 = vmatpush1.msra.mxu0 0.0
    %1183 = vmatprep.subr.mxu0 0.0
    %1184 = vmatpush1.msra.mxu0 0.0
    %1185 = vmatprep.subr.mxu0 0.0
    %1186 = vmatpush1.msra.mxu0 0.0
    %1187 = vmatprep.mubr.f32.mxu0 0.0
    %1188 = vmatmul.mubr.f32.gmra.mrb[0].mxu0 %v1119
    %v1189 = vpop.f32.mrb[0].mxu0
    %v1190 = vadd.f32 0.0, %v1189
    %v1191 = vpop.f32.mrb[0].mxu0
    %1192 = vmatprep.mubr.f32.mxu0 0.0
    %1193 = vmatmul.mubr.f32.gmra.mrb[0].mxu0 %v1120
    %v1194 = vpop.f32.mrb[0].mxu0
    %v1195 = vadd.f32 0.0, %v1194
    %v1196 = vpop.f32.mrb[0].mxu0
    %1197 = vmatprep.mubr.f32.mxu0 0.0
    %1198 = vmatmul.mubr.f32.gmra.mrb[0].mxu0 %v1121
    %v1199 = vpop.f32.mrb[0].mxu0
    %v1200 = vadd.f32 0.0, %v1199
    %v1201 = vpop.f32.mrb[0].mxu0
    %1202 = vmatprep.mubr.f32.mxu0 0.0
    %1203 = vmatmul.mubr.f32.gmra.mrb[0].mxu0 %v1122
    %v1204 = vpop.f32.mrb[0].mxu0
    %v1205 = vadd.f32 0.0, %v1204
    %v1206 = vpop.f32.mrb[0].mxu0
    %1207 = vdwg.mxu0
    %vm1208 = vcmask 261120
    %v1210 = vsel %vm1208, %v1021, 0
    %1212 = vmatprep.subr.mxu0 0.0
    %1213 = vmatpush1.msra.mxu0 %v1101
    %1214 = vmatprep.subr.mxu0 0.0
    %1215 = vmatpush1.msra.mxu0 %v1106
    %1216 = vmatprep.subr.mxu0 0.0
    %1217 = vmatpush1.msra.mxu0 %v1111
    %1218 = vmatprep.subr.mxu0 0.0
    %1219 = vmatpush1.msra.mxu0 %v1116
    %1220 = vmatprep.subr.mxu0 0.0
    %1221 = vmatpush1.msra.mxu0 0.0
    %1222 = vmatprep.subr.mxu0 0.0
    %1223 = vmatpush1.msra.mxu0 0.0
    %1224 = vmatprep.subr.mxu0 0.0
    %1225 = vmatpush1.msra.mxu0 0.0
    %1226 = vmatprep.subr.mxu0 0.0
    %1227 = vmatpush1.msra.mxu0 0.0
    %1228 = vmatprep.subr.mxu0 0.0
    %1229 = vmatpush1.msra.mxu0 0.0
    %1230 = vmatprep.subr.mxu0 0.0
    %1231 = vmatpush1.msra.mxu0 0.0
    %1232 = vmatprep.subr.mxu0 0.0
    %1233 = vmatpush1.msra.mxu0 0.0
    %1234 = vmatprep.subr.mxu0 0.0
    %1235 = vmatpush1.msra.mxu0 0.0
    %1236 = vmatprep.subr.mxu0 0.0
    %1237 = vmatpush1.msra.mxu0 0.0
    %1238 = vmatprep.subr.mxu0 0.0
    %1239 = vmatpush1.msra.mxu0 0.0
    %1240 = vmatprep.subr.mxu0 0.0
    %1241 = vmatpush1.msra.mxu0 0.0
    %1242 = vmatprep.subr.mxu0 0.0
    %1243 = vmatpush1.msra.mxu0 0.0
    %1244 = vmatprep.subr.mxu0 0.0
    %1245 = vmatpush1.msra.mxu0 0.0
    %1246 = vmatprep.subr.mxu0 0.0
    %1247 = vmatpush1.msra.mxu0 0.0
    %1248 = vmatprep.subr.mxu0 0.0
    %1249 = vmatpush1.msra.mxu0 0.0
    %1250 = vmatprep.subr.mxu0 0.0
    %1251 = vmatpush1.msra.mxu0 0.0
    %1252 = vmatprep.subr.mxu0 0.0
    %1253 = vmatpush1.msra.mxu0 0.0
    %1254 = vmatprep.subr.mxu0 0.0
    %1255 = vmatpush1.msra.mxu0 0.0
    %1256 = vmatprep.subr.mxu0 0.0
    %1257 = vmatpush1.msra.mxu0 0.0
    %1258 = vmatprep.subr.mxu0 0.0
    %1259 = vmatpush1.msra.mxu0 0.0
    %1260 = vmatprep.subr.mxu0 0.0
    %1261 = vmatpush1.msra.mxu0 0.0
    %1262 = vmatprep.subr.mxu0 0.0
    %1263 = vmatpush1.msra.mxu0 0.0
    %1264 = vmatprep.subr.mxu0 0.0
    %1265 = vmatpush1.msra.mxu0 0.0
    %1266 = vmatprep.subr.mxu0 0.0
    %1267 = vmatpush1.msra.mxu0 0.0
    %1268 = vmatprep.subr.mxu0 0.0
    %1269 = vmatpush1.msra.mxu0 0.0
    %1270 = vmatprep.subr.mxu0 0.0
    %1271 = vmatpush1.msra.mxu0 0.0
    %1272 = vmatprep.subr.mxu0 0.0
    %1273 = vmatpush1.msra.mxu0 0.0
    %1274 = vmatprep.subr.mxu0 0.0
    %1275 = vmatpush1.msra.mxu0 0.0
    %1276 = vmatprep.mubr.f32.mxu0 0.0
    %1277 = vmatmul.mubr.f32.gmra.mrb[0].mxu0 %v1210
    %v1278 = vpop.f32.mrb[0].mxu0
    %v1279 = vadd.f32 0.0, %v1278
    %v1280 = vpop.f32.mrb[0].mxu0
    %1281 = vdwg.mxu0
    %1282 = vmatprep.subr.mxu0 0.0
    %1283 = vmatpush1.msra.mxu0 %v1190
    %1284 = vmatprep.subr.mxu0 0.0
    %1285 = vmatpush1.msra.mxu0 %v1195
    %1286 = vmatprep.subr.mxu0 0.0
    %1287 = vmatpush1.msra.mxu0 %v1200
    %1288 = vmatprep.subr.mxu0 0.0
    %1289 = vmatpush1.msra.mxu0 %v1205
    %1290 = vmatprep.subr.mxu0 0.0
    %1291 = vmatpush1.msra.mxu0 0.0
    %1292 = vmatprep.subr.mxu0 0.0
    %1293 = vmatpush1.msra.mxu0 0.0
    %1294 = vmatprep.subr.mxu0 0.0
    %1295 = vmatpush1.msra.mxu0 0.0
    %1296 = vmatprep.subr.mxu0 0.0
    %1297 = vmatpush1.msra.mxu0 0.0
    %1298 = vmatprep.subr.mxu0 0.0
    %1299 = vmatpush1.msra.mxu0 0.0
    %1300 = vmatprep.subr.mxu0 0.0
    %1301 = vmatpush1.msra.mxu0 0.0
    %1302 = vmatprep.subr.mxu0 0.0
    %1303 = vmatpush1.msra.mxu0 0.0
    %1304 = vmatprep.subr.mxu0 0.0
    %1305 = vmatpush1.msra.mxu0 0.0
    %1306 = vmatprep.subr.mxu0 0.0
    %1307 = vmatpush1.msra.mxu0 0.0
    %1308 = vmatprep.subr.mxu0 0.0
    %1309 = vmatpush1.msra.mxu0 0.0
    %1310 = vmatprep.subr.mxu0 0.0
    %1311 = vmatpush1.msra.mxu0 0.0
    %1312 = vmatprep.subr.mxu0 0.0
    %1313 = vmatpush1.msra.mxu0 0.0
    %1314 = vmatprep.subr.mxu0 0.0
    %1315 = vmatpush1.msra.mxu0 0.0
    %1316 = vmatprep.subr.mxu0 0.0
    %1317 = vmatpush1.msra.mxu0 0.0
    %1318 = vmatprep.subr.mxu0 0.0
    %1319 = vmatpush1.msra.mxu0 0.0
    %1320 = vmatprep.subr.mxu0 0.0
    %1321 = vmatpush1.msra.mxu0 0.0
    %1322 = vmatprep.subr.mxu0 0.0
    %1323 = vmatpush1.msra.mxu0 0.0
    %1324 = vmatprep.subr.mxu0 0.0
    %1325 = vmatpush1.msra.mxu0 0.0
    %1326 = vmatprep.subr.mxu0 0.0
    %1327 = vmatpush1.msra.mxu0 0.0
    %1328 = vmatprep.subr.mxu0 0.0
    %1329 = vmatpush1.msra.mxu0 0.0
    %1330 = vmatprep.subr.mxu0 0.0
    %1331 = vmatpush1.msra.mxu0 0.0
    %1332 = vmatprep.subr.mxu0 0.0
    %1333 = vmatpush1.msra.mxu0 0.0
    %1334 = vmatprep.subr.mxu0 0.0
    %1335 = vmatpush1.msra.mxu0 0.0
    %1336 = vmatprep.subr.mxu0 0.0
    %1337 = vmatpush1.msra.mxu0 0.0
    %1338 = vmatprep.subr.mxu0 0.0
    %1339 = vmatpush1.msra.mxu0 0.0
    %1340 = vmatprep.subr.mxu0 0.0
    %1341 = vmatpush1.msra.mxu0 0.0
    %1342 = vmatprep.subr.mxu0 0.0
    %1343 = vmatpush1.msra.mxu0 0.0
    %1344 = vmatprep.subr.mxu0 0.0
    %1345 = vmatpush1.msra.mxu0 0.0
    %1346 = vmatprep.mubr.f32.mxu0 0.0
    %1347 = vmatmul.mubr.f32.gmra.mrb[0].mxu0 %v1210
    %v1348 = vpop.f32.mrb[0].mxu0
    %v1349 = vadd.f32 0.0, %v1348
    %v1350 = vpop.f32.mrb[0].mxu0
    %1351 = vdwg.mxu0
    %v1352 = vmul.f32 %v1279, 0.001953125
    %v1353 = vmul.f32 %v1349, 0.001953125
    %v1354 = vmul.f32 %v1352, %v1352
    %v1355 = vsub.f32 %v1353, %v1354
    %v1356 = vmax.f32 %v1355, 0.0
    %v1357 = vadd.f32 %v1356, 1e-06
    %v1358 = vrsqrt.pop %v1357
    %v1360 = vsel %vm389, %v1022, 0
    %v1363 = vsel %vm389, %v1023, 0
    %v1366 = vsel %vm389, %v1024, 0
    %v1369 = vsel %vm389, %v1025, 0
    %v1372 = vsel %vm396, %v1352, 0
    %1374 = vmatprep.subr.mxu0 0.0
    %1375 = vmatpush1.msra.mxu0 %v1372
    %1376 = vmatprep.subr.mxu0 0.0
    %1377 = vmatpush1.msra.mxu0 0.0
    %1378 = vmatprep.subr.mxu0 0.0
    %1379 = vmatpush1.msra.mxu0 0.0
    %1380 = vmatprep.subr.mxu0 0.0
    %1381 = vmatpush1.msra.mxu0 0.0
    %1382 = vmatprep.subr.mxu0 0.0
    %1383 = vmatpush1.msra.mxu0 0.0
    %1384 = vmatprep.subr.mxu0 0.0
    %1385 = vmatpush1.msra.mxu0 0.0
    %1386 = vmatprep.subr.mxu0 0.0
    %1387 = vmatpush1.msra.mxu0 0.0
    %1388 = vmatprep.subr.mxu0 0.0
    %1389 = vmatpush1.msra.mxu0 0.0
    %1390 = vmatprep.subr.mxu0 0.0
    %1391 = vmatpush1.msra.mxu0 0.0
    %1392 = vmatprep.subr.mxu0 0.0
    %1393 = vmatpush1.msra.mxu0 0.0
    %1394 = vmatprep.subr.mxu0 0.0
    %1395 = vmatpush1.msra.mxu0 0.0
    %1396 = vmatprep.subr.mxu0 0.0
    %1397 = vmatpush1.msra.mxu0 0.0
    %1398 = vmatprep.subr.mxu0 0.0
    %1399 = vmatpush1.msra.mxu0 0.0
    %1400 = vmatprep.subr.mxu0 0.0
    %1401 = vmatpush1.msra.mxu0 0.0
    %1402 = vmatprep.subr.mxu0 0.0
    %1403 = vmatpush1.msra.mxu0 0.0
    %1404 = vmatprep.subr.mxu0 0.0
    %1405 = vmatpush1.msra.mxu0 0.0
    %1406 = vmatprep.subr.mxu0 0.0
    %1407 = vmatpush1.msra.mxu0 0.0
    %1408 = vmatprep.subr.mxu0 0.0
    %1409 = vmatpush1.msra.mxu0 0.0
    %1410 = vmatprep.subr.mxu0 0.0
    %1411 = vmatpush1.msra.mxu0 0.0
    %1412 = vmatprep.subr.mxu0 0.0
    %1413 = vmatpush1.msra.mxu0 0.0
    %1414 = vmatprep.subr.mxu0 0.0
    %1415 = vmatpush1.msra.mxu0 0.0
    %1416 = vmatprep.subr.mxu0 0.0
    %1417 = vmatpush1.msra.mxu0 0.0
    %1418 = vmatprep.subr.mxu0 0.0
    %1419 = vmatpush1.msra.mxu0 0.0
    %1420 = vmatprep.subr.mxu0 0.0
    %1421 = vmatpush1.msra.mxu0 0.0
    %1422 = vmatprep.subr.mxu0 0.0
    %1423 = vmatpush1.msra.mxu0 0.0
    %1424 = vmatprep.subr.mxu0 0.0
    %1425 = vmatpush1.msra.mxu0 0.0
    %1426 = vmatprep.subr.mxu0 0.0
    %1427 = vmatpush1.msra.mxu0 0.0
    %1428 = vmatprep.subr.mxu0 0.0
    %1429 = vmatpush1.msra.mxu0 0.0
    %1430 = vmatprep.subr.mxu0 0.0
    %1431 = vmatpush1.msra.mxu0 0.0
    %1432 = vmatprep.subr.mxu0 0.0
    %1433 = vmatpush1.msra.mxu0 0.0
    %1434 = vmatprep.subr.mxu0 0.0
    %1435 = vmatpush1.msra.mxu0 0.0
    %1436 = vmatprep.subr.mxu0 0.0
    %1437 = vmatpush1.msra.mxu0 0.0
    %1438 = vmatprep.mubr.f32.mxu0 0.0
    %1439 = vmatmul.mubr.f32.gmra.mrb[0].mxu0 %v1360
    %v1440 = vpop.f32.mrb[0].mxu0
    %v1441 = vadd.f32 0.0, %v1440
    %v1442 = vpop.f32.mrb[0].mxu0
    %1443 = vmatprep.mubr.f32.mxu0 0.0
    %1444 = vmatmul.mubr.f32.gmra.mrb[0].mxu0 %v1363
    %v1445 = vpop.f32.mrb[0].mxu0
    %v1446 = vadd.f32 0.0, %v1445
    %v1447 = vpop.f32.mrb[0].mxu0
    %1448 = vmatprep.mubr.f32.mxu0 0.0
    %1449 = vmatmul.mubr.f32.gmra.mrb[0].mxu0 %v1366
    %v1450 = vpop.f32.mrb[0].mxu0
    %v1451 = vadd.f32 0.0, %v1450
    %v1452 = vpop.f32.mrb[0].mxu0
    %1453 = vmatprep.mubr.f32.mxu0 0.0
    %1454 = vmatmul.mubr.f32.gmra.mrb[0].mxu0 %v1369
    %v1455 = vpop.f32.mrb[0].mxu0
    %v1456 = vadd.f32 0.0, %v1455
    %v1457 = vpop.f32.mrb[0].mxu0
    %1458 = vdwg.mxu0
    %v1460 = vsel %vm475, %v1441, 0
    %v1463 = vsel %vm475, %v1446, 0
    %v1466 = vsel %vm475, %v1451, 0
    %v1469 = vsel %vm475, %v1456, 0
    %1471 = vmatprep.subr.mxu0 0.0
    %1472 = vmatpush1.msra.mxu0 %v484
    %1473 = vmatprep.subr.mxu0 0.0
    %1474 = vmatpush1.msra.mxu0 0.0
    %1475 = vmatprep.subr.mxu0 0.0
    %1476 = vmatpush1.msra.mxu0 0.0
    %1477 = vmatprep.subr.mxu0 0.0
    %1478 = vmatpush1.msra.mxu0 0.0
    %1479 = vmatprep.subr.mxu0 0.0
    %1480 = vmatpush1.msra.mxu0 0.0
    %1481 = vmatprep.subr.mxu0 0.0
    %1482 = vmatpush1.msra.mxu0 0.0
    %1483 = vmatprep.subr.mxu0 0.0
    %1484 = vmatpush1.msra.mxu0 0.0
    %1485 = vmatprep.subr.mxu0 0.0
    %1486 = vmatpush1.msra.mxu0 0.0
    %1487 = vmatprep.subr.mxu0 0.0
    %1488 = vmatpush1.msra.mxu0 0.0
    %1489 = vmatprep.subr.mxu0 0.0
    %1490 = vmatpush1.msra.mxu0 0.0
    %1491 = vmatprep.subr.mxu0 0.0
    %1492 = vmatpush1.msra.mxu0 0.0
    %1493 = vmatprep.subr.mxu0 0.0
    %1494 = vmatpush1.msra.mxu0 0.0
    %1495 = vmatprep.subr.mxu0 0.0
    %1496 = vmatpush1.msra.mxu0 0.0
    %1497 = vmatprep.subr.mxu0 0.0
    %1498 = vmatpush1.msra.mxu0 0.0
    %1499 = vmatprep.subr.mxu0 0.0
    %1500 = vmatpush1.msra.mxu0 0.0
    %1501 = vmatprep.subr.mxu0 0.0
    %1502 = vmatpush1.msra.mxu0 0.0
    %1503 = vmatprep.subr.mxu0 0.0
    %1504 = vmatpush1.msra.mxu0 0.0
    %1505 = vmatprep.subr.mxu0 0.0
    %1506 = vmatpush1.msra.mxu0 0.0
    %1507 = vmatprep.subr.mxu0 0.0
    %1508 = vmatpush1.msra.mxu0 0.0
    %1509 = vmatprep.subr.mxu0 0.0
    %1510 = vmatpush1.msra.mxu0 0.0
    %1511 = vmatprep.subr.mxu0 0.0
    %1512 = vmatpush1.msra.mxu0 0.0
    %1513 = vmatprep.subr.mxu0 0.0
    %1514 = vmatpush1.msra.mxu0 0.0
    %1515 = vmatprep.subr.mxu0 0.0
    %1516 = vmatpush1.msra.mxu0 0.0
    %1517 = vmatprep.subr.mxu0 0.0
    %1518 = vmatpush1.msra.mxu0 0.0
    %1519 = vmatprep.subr.mxu0 0.0
    %1520 = vmatpush1.msra.mxu0 0.0
    %1521 = vmatprep.subr.mxu0 0.0
    %1522 = vmatpush1.msra.mxu0 0.0
    %1523 = vmatprep.subr.mxu0 0.0
    %1524 = vmatpush1.msra.mxu0 0.0
    %1525 = vmatprep.subr.mxu0 0.0
    %1526 = vmatpush1.msra.mxu0 0.0
    %1527 = vmatprep.subr.mxu0 0.0
    %1528 = vmatpush1.msra.mxu0 0.0
    %1529 = vmatprep.subr.mxu0 0.0
    %1530 = vmatpush1.msra.mxu0 0.0
    %1531 = vmatprep.subr.mxu0 0.0
    %1532 = vmatpush1.msra.mxu0 0.0
    %1533 = vmatprep.subr.mxu0 0.0
    %1534 = vmatpush1.msra.mxu0 0.0
    %1535 = vmatprep.mubr.f32.mxu0 0.0
    %1536 = vmatmul.mubr.f32.gmra.mrb[0].mxu0 %v1460
    %v1537 = vpop.f32.mrb[0].mxu0
    %v1538 = vadd.f32 0.0, %v1537
    %v1539 = vpop.f32.mrb[0].mxu0
    %1540 = vmatprep.mubr.f32.mxu0 0.0
    %1541 = vmatmul.mubr.f32.gmra.mrb[0].mxu0 %v1463
    %v1542 = vpop.f32.mrb[0].mxu0
    %v1543 = vadd.f32 0.0, %v1542
    %v1544 = vpop.f32.mrb[0].mxu0
    %1545 = vmatprep.mubr.f32.mxu0 0.0
    %1546 = vmatmul.mubr.f32.gmra.mrb[0].mxu0 %v1466
    %v1547 = vpop.f32.mrb[0].mxu0
    %v1548 = vadd.f32 0.0, %v1547
    %v1549 = vpop.f32.mrb[0].mxu0
    %1550 = vmatprep.mubr.f32.mxu0 0.0
    %1551 = vmatmul.mubr.f32.gmra.mrb[0].mxu0 %v1469
    %v1552 = vpop.f32.mrb[0].mxu0
    %v1553 = vadd.f32 0.0, %v1552
    %v1554 = vpop.f32.mrb[0].mxu0
    %1555 = vdwg.mxu0
    %v1557 = vsel %vm396, %v1358, 0
    %1559 = vmatprep.subr.mxu0 0.0
    %1560 = vmatpush1.msra.mxu0 %v1557
    %1561 = vmatprep.subr.mxu0 0.0
    %1562 = vmatpush1.msra.mxu0 0.0
    %1563 = vmatprep.subr.mxu0 0.0
    %1564 = vmatpush1.msra.mxu0 0.0
    %1565 = vmatprep.subr.mxu0 0.0
    %1566 = vmatpush1.msra.mxu0 0.0
    %1567 = vmatprep.subr.mxu0 0.0
    %1568 = vmatpush1.msra.mxu0 0.0
    %1569 = vmatprep.subr.mxu0 0.0
    %1570 = vmatpush1.msra.mxu0 0.0
    %1571 = vmatprep.subr.mxu0 0.0
    %1572 = vmatpush1.msra.mxu0 0.0
    %1573 = vmatprep.subr.mxu0 0.0
    %1574 = vmatpush1.msra.mxu0 0.0
    %1575 = vmatprep.subr.mxu0 0.0
    %1576 = vmatpush1.msra.mxu0 0.0
    %1577 = vmatprep.subr.mxu0 0.0
    %1578 = vmatpush1.msra.mxu0 0.0
    %1579 = vmatprep.subr.mxu0 0.0
    %1580 = vmatpush1.msra.mxu0 0.0
    %1581 = vmatprep.subr.mxu0 0.0
    %1582 = vmatpush1.msra.mxu0 0.0
    %1583 = vmatprep.subr.mxu0 0.0
    %1584 = vmatpush1.msra.mxu0 0.0
    %1585 = vmatprep.subr.mxu0 0.0
    %1586 = vmatpush1.msra.mxu0 0.0
    %1587 = vmatprep.subr.mxu0 0.0
    %1588 = vmatpush1.msra.mxu0 0.0
    %1589 = vmatprep.subr.mxu0 0.0
    %1590 = vmatpush1.msra.mxu0 0.0
    %1591 = vmatprep.subr.mxu0 0.0
    %1592 = vmatpush1.msra.mxu0 0.0
    %1593 = vmatprep.subr.mxu0 0.0
    %1594 = vmatpush1.msra.mxu0 0.0
    %1595 = vmatprep.subr.mxu0 0.0
    %1596 = vmatpush1.msra.mxu0 0.0
    %1597 = vmatprep.subr.mxu0 0.0
    %1598 = vmatpush1.msra.mxu0 0.0
    %1599 = vmatprep.subr.mxu0 0.0
    %1600 = vmatpush1.msra.mxu0 0.0
    %1601 = vmatprep.subr.mxu0 0.0
    %1602 = vmatpush1.msra.mxu0 0.0
    %1603 = vmatprep.subr.mxu0 0.0
    %1604 = vmatpush1.msra.mxu0 0.0
    %1605 = vmatprep.subr.mxu0 0.0
    %1606 = vmatpush1.msra.mxu0 0.0
    %1607 = vmatprep.subr.mxu0 0.0
    %1608 = vmatpush1.msra.mxu0 0.0
    %1609 = vmatprep.subr.mxu0 0.0
    %1610 = vmatpush1.msra.mxu0 0.0
    %1611 = vmatprep.subr.mxu0 0.0
    %1612 = vmatpush1.msra.mxu0 0.0
    %1613 = vmatprep.subr.mxu0 0.0
    %1614 = vmatpush1.msra.mxu0 0.0
    %1615 = vmatprep.subr.mxu0 0.0
    %1616 = vmatpush1.msra.mxu0 0.0
    %1617 = vmatprep.subr.mxu0 0.0
    %1618 = vmatpush1.msra.mxu0 0.0
    %1619 = vmatprep.subr.mxu0 0.0
    %1620 = vmatpush1.msra.mxu0 0.0
    %1621 = vmatprep.subr.mxu0 0.0
    %1622 = vmatpush1.msra.mxu0 0.0
    %1623 = vmatprep.mubr.f32.mxu0 0.0
    %1624 = vmatmul.mubr.f32.gmra.mrb[0].mxu0 %v1360
    %v1625 = vpop.f32.mrb[0].mxu0
    %v1626 = vadd.f32 0.0, %v1625
    %v1627 = vpop.f32.mrb[0].mxu0
    %1628 = vmatprep.mubr.f32.mxu0 0.0
    %1629 = vmatmul.mubr.f32.gmra.mrb[0].mxu0 %v1363
    %v1630 = vpop.f32.mrb[0].mxu0
    %v1631 = vadd.f32 0.0, %v1630
    %v1632 = vpop.f32.mrb[0].mxu0
    %1633 = vmatprep.mubr.f32.mxu0 0.0
    %1634 = vmatmul.mubr.f32.gmra.mrb[0].mxu0 %v1366
    %v1635 = vpop.f32.mrb[0].mxu0
    %v1636 = vadd.f32 0.0, %v1635
    %v1637 = vpop.f32.mrb[0].mxu0
    %1638 = vmatprep.mubr.f32.mxu0 0.0
    %1639 = vmatmul.mubr.f32.gmra.mrb[0].mxu0 %v1369
    %v1640 = vpop.f32.mrb[0].mxu0
    %v1641 = vadd.f32 0.0, %v1640
    %v1642 = vpop.f32.mrb[0].mxu0
    %1643 = vdwg.mxu0
    %v1645 = vsel %vm475, %v1626, 0
    %v1648 = vsel %vm475, %v1631, 0
    %v1651 = vsel %vm475, %v1636, 0
    %v1654 = vsel %vm475, %v1641, 0
    %1656 = vmatprep.subr.mxu0 0.0
    %1657 = vmatpush1.msra.mxu0 %v484
    %1658 = vmatprep.subr.mxu0 0.0
    %1659 = vmatpush1.msra.mxu0 0.0
    %1660 = vmatprep.subr.mxu0 0.0
    %1661 = vmatpush1.msra.mxu0 0.0
    %1662 = vmatprep.subr.mxu0 0.0
    %1663 = vmatpush1.msra.mxu0 0.0
    %1664 = vmatprep.subr.mxu0 0.0
    %1665 = vmatpush1.msra.mxu0 0.0
    %1666 = vmatprep.subr.mxu0 0.0
    %1667 = vmatpush1.msra.mxu0 0.0
    %1668 = vmatprep.subr.mxu0 0.0
    %1669 = vmatpush1.msra.mxu0 0.0
    %1670 = vmatprep.subr.mxu0 0.0
    %1671 = vmatpush1.msra.mxu0 0.0
    %1672 = vmatprep.subr.mxu0 0.0
    %1673 = vmatpush1.msra.mxu0 0.0
    %1674 = vmatprep.subr.mxu0 0.0
    %1675 = vmatpush1.msra.mxu0 0.0
    %1676 = vmatprep.subr.mxu0 0.0
    %1677 = vmatpush1.msra.mxu0 0.0
    %1678 = vmatprep.subr.mxu0 0.0
    %1679 = vmatpush1.msra.mxu0 0.0
    %1680 = vmatprep.subr.mxu0 0.0
    %1681 = vmatpush1.msra.mxu0 0.0
    %1682 = vmatprep.subr.mxu0 0.0
    %1683 = vmatpush1.msra.mxu0 0.0
    %1684 = vmatprep.subr.mxu0 0.0
    %1685 = vmatpush1.msra.mxu0 0.0
    %1686 = vmatprep.subr.mxu0 0.0
    %1687 = vmatpush1.msra.mxu0 0.0
    %1688 = vmatprep.subr.mxu0 0.0
    %1689 = vmatpush1.msra.mxu0 0.0
    %1690 = vmatprep.subr.mxu0 0.0
    %1691 = vmatpush1.msra.mxu0 0.0
    %1692 = vmatprep.subr.mxu0 0.0
    %1693 = vmatpush1.msra.mxu0 0.0
    %1694 = vmatprep.subr.mxu0 0.0
    %1695 = vmatpush1.msra.mxu0 0.0
    %1696 = vmatprep.subr.mxu0 0.0
    %1697 = vmatpush1.msra.mxu0 0.0
    %1698 = vmatprep.subr.mxu0 0.0
    %1699 = vmatpush1.msra.mxu0 0.0
    %1700 = vmatprep.subr.mxu0 0.0
    %1701 = vmatpush1.msra.mxu0 0.0
    %1702 = vmatprep.subr.mxu0 0.0
    %1703 = vmatpush1.msra.mxu0 0.0
    %1704 = vmatprep.subr.mxu0 0.0
    %1705 = vmatpush1.msra.mxu0 0.0
    %1706 = vmatprep.subr.mxu0 0.0
    %1707 = vmatpush1.msra.mxu0 0.0
    %1708 = vmatprep.subr.mxu0 0.0
    %1709 = vmatpush1.msra.mxu0 0.0
    %1710 = vmatprep.subr.mxu0 0.0
    %1711 = vmatpush1.msra.mxu0 0.0
    %1712 = vmatprep.subr.mxu0 0.0
    %1713 = vmatpush1.msra.mxu0 0.0
    %1714 = vmatprep.subr.mxu0 0.0
    %1715 = vmatpush1.msra.mxu0 0.0
    %1716 = vmatprep.subr.mxu0 0.0
    %1717 = vmatpush1.msra.mxu0 0.0
    %1718 = vmatprep.subr.mxu0 0.0
    %1719 = vmatpush1.msra.mxu0 0.0
    %1720 = vmatprep.mubr.f32.mxu0 0.0
    %1721 = vmatmul.mubr.f32.gmra.mrb[0].mxu0 %v1645
    %v1722 = vpop.f32.mrb[0].mxu0
    %v1723 = vadd.f32 0.0, %v1722
    %v1724 = vpop.f32.mrb[0].mxu0
    %1725 = vmatprep.mubr.f32.mxu0 0.0
    %1726 = vmatmul.mubr.f32.gmra.mrb[0].mxu0 %v1648
    %v1727 = vpop.f32.mrb[0].mxu0
    %v1728 = vadd.f32 0.0, %v1727
    %v1729 = vpop.f32.mrb[0].mxu0
    %1730 = vmatprep.mubr.f32.mxu0 0.0
    %1731 = vmatmul.mubr.f32.gmra.mrb[0].mxu0 %v1651
    %v1732 = vpop.f32.mrb[0].mxu0
    %v1733 = vadd.f32 0.0, %v1732
    %v1734 = vpop.f32.mrb[0].mxu0
    %1735 = vmatprep.mubr.f32.mxu0 0.0
    %1736 = vmatmul.mubr.f32.gmra.mrb[0].mxu0 %v1654
    %v1737 = vpop.f32.mrb[0].mxu0
    %v1738 = vadd.f32 0.0, %v1737
    %v1739 = vpop.f32.mrb[0].mxu0
    %1740 = vdwg.mxu0
    %v1741 = vsub.f32 %v1017, %v1538
    %v1742 = vsub.f32 %v1018, %v1543
    %v1743 = vsub.f32 %v1019, %v1548
    %v1744 = vsub.f32 %v1020, %v1553
    %v1745 = vmul.f32 %v1741, %v1723
    %v1746 = vmul.f32 %v1742, %v1728
    %v1747 = vmul.f32 %v1743, %v1733
    %v1748 = vmul.f32 %v1744, %v1738
    %1750 = vset.pattern.permute.xlu0 0
    %1751 = vperm.xlu0 %1750, %v1026
    %v1752 = vpop.permute.xlu0 %1751
    %1755 = vset.pattern.permute.xlu0 0
    %1756 = vperm.xlu0 %1755, %v1027
    %v1757 = vpop.permute.xlu0 %1756
    %1760 = vset.pattern.permute.xlu0 0
    %1761 = vperm.xlu0 %1760, %v1028
    %v1762 = vpop.permute.xlu0 %1761
    %1765 = vset.pattern.permute.xlu0 0
    %1766 = vperm.xlu0 %1765, %v1029
    %v1767 = vpop.permute.xlu0 %1766
    %v1769 = vmul.f32 %v1745, %v1752
    %v1770 = vmul.f32 %v1746, %v1757
    %v1771 = vmul.f32 %v1747, %v1762
    %v1772 = vmul.f32 %v1748, %v1767
    %1774 = vset.pattern.permute.xlu0 0
    %1775 = vperm.xlu0 %1774, %v1030
    %v1776 = vpop.permute.xlu0 %1775
    %1779 = vset.pattern.permute.xlu0 0
    %1780 = vperm.xlu0 %1779, %v1031
    %v1781 = vpop.permute.xlu0 %1780
    %1784 = vset.pattern.permute.xlu0 0
    %1785 = vperm.xlu0 %1784, %v1032
    %v1786 = vpop.permute.xlu0 %1785
    %1789 = vset.pattern.permute.xlu0 0
    %1790 = vperm.xlu0 %1789, %v1033
    %v1791 = vpop.permute.xlu0 %1790
    %v1793 = vadd.f32 %v1769, %v1776
    %v1794 = vadd.f32 %v1770, %v1781
    %v1795 = vadd.f32 %v1771, %v1786
    %v1796 = vadd.f32 %v1772, %v1791
    %v1797 = vxor.u32 %v1793, 2147483648
    %v1798 = vxor.u32 %v1794, 2147483648
    %v1799 = vxor.u32 %v1795, 2147483648
    %v1800 = vxor.u32 %v1796, 2147483648
    %v1801 = vmul.f32 %v1797, 1.442695
    %v1802 = vpow.pop %v1801
    %v1803 = vmul.f32 %v1798, 1.442695
    %v1804 = vpow.pop %v1803
    %v1805 = vmul.f32 %v1799, 1.442695
    %v1806 = vpow.pop %v1805
    %v1807 = vmul.f32 %v1800, 1.442695
    %v1808 = vpow.pop %v1807
    %v1809 = vadd.f32 %v1802, 1.0
    %v1810 = vadd.f32 %v1804, 1.0
    %v1811 = vadd.f32 %v1806, 1.0
    %v1812 = vadd.f32 %v1808, 1.0
    %v1813 = vrcp.pop %v1809
    %v1814 = vmul.f32 1.0, %v1813
    %v1815 = vrcp.pop %v1810
    %v1816 = vmul.f32 1.0, %v1815
    %v1817 = vrcp.pop %v1811
    %v1818 = vmul.f32 1.0, %v1817
    %v1819 = vrcp.pop %v1812
    %v1820 = vmul.f32 1.0, %v1819
    %v1821 = vmul.f32 %v1793, %v1814
    %v1822 = vmul.f32 %v1794, %v1816
    %v1823 = vmul.f32 %v1795, %v1818
    %v1824 = vmul.f32 %v1796, %v1820
    %v1825 = vld [vmem:[%s14] sm:$0xff]
    %v1826 = vld [vmem:[%s14 + $0x8] sm:$0xff]
    %v1827 = vld [vmem:[%s14 + $0x10] sm:$0xff]
    %v1828 = vld [vmem:[%s14 + $0x18] sm:$0xff]
    %v1829 = vld [vmem:[%s15] sm:$0xff]
    %v1830 = vld [vmem:[%s15 + $0x8] sm:$0xff]
    %v1831 = vld [vmem:[%s15 + $0x10] sm:$0xff]
    %v1832 = vld [vmem:[%s15 + $0x18] sm:$0xff]
    %1833 = vrot.lane.b32.xlu0 %v1821, 1
    %v1834 = vpop.permute.xlu0 %1833
    %1835 = vrot.lane.b32.xlu0 %v1822, 1
    %v1836 = vpop.permute.xlu0 %1835
    %1837 = vrot.lane.b32.xlu0 %v1823, 1
    %v1838 = vpop.permute.xlu0 %1837
    %1839 = vrot.lane.b32.xlu0 %v1824, 1
    %v1840 = vpop.permute.xlu0 %1839
    %v1841 = vsel %vm784, 0.0, %v1834
    %v1842 = vsel %vm784, 0.0, %v1836
    %v1843 = vsel %vm784, 0.0, %v1838
    %v1844 = vsel %vm784, 0.0, %v1840
    %1845 = vrot.lane.b32.xlu0 %v1821, 127
    %v1846 = vpop.permute.xlu0 %1845
    %1847 = vrot.lane.b32.xlu0 %v1822, 127
    %v1848 = vpop.permute.xlu0 %1847
    %1849 = vrot.lane.b32.xlu0 %v1823, 127
    %v1850 = vpop.permute.xlu0 %1849
    %1851 = vrot.lane.b32.xlu0 %v1824, 127
    %v1852 = vpop.permute.xlu0 %1851
    %v1853 = vsel %vm791, 0.0, %v1846
    %v1854 = vsel %vm791, 0.0, %v1848
    %v1855 = vsel %vm791, 0.0, %v1850
    %v1856 = vsel %vm791, 0.0, %v1852
    %1858 = vset.pattern.permute.xlu0 0
    %1859 = vperm.xlu0 %1858, %v1829
    %v1860 = vpop.permute.xlu0 %1859
    %1863 = vset.pattern.permute.xlu0 0
    %1864 = vperm.xlu0 %1863, %v1830
    %v1865 = vpop.permute.xlu0 %1864
    %1868 = vset.pattern.permute.xlu0 0
    %1869 = vperm.xlu0 %1868, %v1831
    %v1870 = vpop.permute.xlu0 %1869
    %1873 = vset.pattern.permute.xlu0 0
    %1874 = vperm.xlu0 %1873, %v1832
    %v1875 = vpop.permute.xlu0 %1874
    %vm1877 = vcmask 785408
    %v1879 = vsel %vm1877, %v1825, 0
    %v1882 = vsel %vm1877, %v1826, 0
    %v1885 = vsel %vm1877, %v1827, 0
    %v1888 = vsel %vm1877, %v1828, 0
    %1890 = vmatprep.subr.mxu0 0.0
    %1891 = vmatpush1.msra.mxu0 %v1841
    %1892 = vmatprep.subr.mxu0 0.0
    %1893 = vmatpush1.msra.mxu0 %v1842
    %1894 = vmatprep.subr.mxu0 0.0
    %1895 = vmatpush1.msra.mxu0 %v1843
    %1896 = vmatprep.subr.mxu0 0.0
    %1897 = vmatpush1.msra.mxu0 %v1844
    %1898 = vmatprep.subr.mxu0 0.0
    %1899 = vmatpush1.msra.mxu0 %v1821
    %1900 = vmatprep.subr.mxu0 0.0
    %1901 = vmatpush1.msra.mxu0 %v1822
    %1902 = vmatprep.subr.mxu0 0.0
    %1903 = vmatpush1.msra.mxu0 %v1823
    %1904 = vmatprep.subr.mxu0 0.0
    %1905 = vmatpush1.msra.mxu0 %v1824
    %1906 = vmatprep.subr.mxu0 0.0
    %1907 = vmatpush1.msra.mxu0 %v1853
    %1908 = vmatprep.subr.mxu0 0.0
    %1909 = vmatpush1.msra.mxu0 %v1854
    %1910 = vmatprep.subr.mxu0 0.0
    %1911 = vmatpush1.msra.mxu0 %v1855
    %1912 = vmatprep.subr.mxu0 0.0
    %1913 = vmatpush1.msra.mxu0 %v1856
    %1914 = vmatprep.subr.mxu0 0.0
    %1915 = vmatpush1.msra.mxu0 0.0
    %1916 = vmatprep.subr.mxu0 0.0
    %1917 = vmatpush1.msra.mxu0 0.0
    %1918 = vmatprep.subr.mxu0 0.0
    %1919 = vmatpush1.msra.mxu0 0.0
    %1920 = vmatprep.subr.mxu0 0.0
    %1921 = vmatpush1.msra.mxu0 0.0
    %1922 = vmatprep.subr.mxu0 0.0
    %1923 = vmatpush1.msra.mxu0 0.0
    %1924 = vmatprep.subr.mxu0 0.0
    %1925 = vmatpush1.msra.mxu0 0.0
    %1926 = vmatprep.subr.mxu0 0.0
    %1927 = vmatpush1.msra.mxu0 0.0
    %1928 = vmatprep.subr.mxu0 0.0
    %1929 = vmatpush1.msra.mxu0 0.0
    %1930 = vmatprep.subr.mxu0 0.0
    %1931 = vmatpush1.msra.mxu0 0.0
    %1932 = vmatprep.subr.mxu0 0.0
    %1933 = vmatpush1.msra.mxu0 0.0
    %1934 = vmatprep.subr.mxu0 0.0
    %1935 = vmatpush1.msra.mxu0 0.0
    %1936 = vmatprep.subr.mxu0 0.0
    %1937 = vmatpush1.msra.mxu0 0.0
    %1938 = vmatprep.subr.mxu0 0.0
    %1939 = vmatpush1.msra.mxu0 0.0
    %1940 = vmatprep.subr.mxu0 0.0
    %1941 = vmatpush1.msra.mxu0 0.0
    %1942 = vmatprep.subr.mxu0 0.0
    %1943 = vmatpush1.msra.mxu0 0.0
    %1944 = vmatprep.subr.mxu0 0.0
    %1945 = vmatpush1.msra.mxu0 0.0
    %1946 = vmatprep.subr.mxu0 0.0
    %1947 = vmatpush1.msra.mxu0 0.0
    %1948 = vmatprep.subr.mxu0 0.0
    %1949 = vmatpush1.msra.mxu0 0.0
    %1950 = vmatprep.subr.mxu0 0.0
    %1951 = vmatpush1.msra.mxu0 0.0
    %1952 = vmatprep.subr.mxu0 0.0
    %1953 = vmatpush1.msra.mxu0 0.0
    %1954 = vmatprep.mubr.f32.mxu0 0.0
    %1955 = vmatmul.mubr.f32.gmra.mrb[0].mxu0 %v1879
    %v1956 = vpop.f32.mrb[0].mxu0
    %v1957 = vadd.f32 %v1860, %v1956
    %v1958 = vpop.f32.mrb[0].mxu0
    %1959 = vmatprep.mubr.f32.mxu0 0.0
    %1960 = vmatmul.mubr.f32.gmra.mrb[0].mxu0 %v1882
    %v1961 = vpop.f32.mrb[0].mxu0
    %v1962 = vadd.f32 %v1865, %v1961
    %v1963 = vpop.f32.mrb[0].mxu0
    %1964 = vmatprep.mubr.f32.mxu0 0.0
    %1965 = vmatmul.mubr.f32.gmra.mrb[0].mxu0 %v1885
    %v1966 = vpop.f32.mrb[0].mxu0
    %v1967 = vadd.f32 %v1870, %v1966
    %v1968 = vpop.f32.mrb[0].mxu0
    %1969 = vmatprep.mubr.f32.mxu0 0.0
    %1970 = vmatmul.mubr.f32.gmra.mrb[0].mxu0 %v1888
    %v1971 = vpop.f32.mrb[0].mxu0
    %v1972 = vadd.f32 %v1875, %v1971
    %v1973 = vpop.f32.mrb[0].mxu0
    %1974 = vdwg.mxu0
    %v1975 = vld [vmem:[%s16] sm:$0xff]
    %v1976 = vld [vmem:[%s16 + $0x8] sm:$0xff]
    %v1977 = vld [vmem:[%s16 + $0x10] sm:$0xff]
    %v1978 = vld [vmem:[%s16 + $0x18] sm:$0xff]
    %v1979 = vld [vmem:[%s17] sm:$0xff]
    %v1980 = vld [vmem:[%s17 + $0x8] sm:$0xff]
    %v1981 = vld [vmem:[%s17 + $0x10] sm:$0xff]
    %v1982 = vld [vmem:[%s17 + $0x18] sm:$0xff]
    %1984 = vset.pattern.permute.xlu0 0
    %1985 = vperm.xlu0 %1984, %v1979
    %v1986 = vpop.permute.xlu0 %1985
    %1989 = vset.pattern.permute.xlu0 0
    %1990 = vperm.xlu0 %1989, %v1980
    %v1991 = vpop.permute.xlu0 %1990
    %1994 = vset.pattern.permute.xlu0 0
    %1995 = vperm.xlu0 %1994, %v1981
    %v1996 = vpop.permute.xlu0 %1995
    %1999 = vset.pattern.permute.xlu0 0
    %2000 = vperm.xlu0 %1999, %v1982
    %v2001 = vpop.permute.xlu0 %2000
    %v2004 = vsel %vm238, %v1975, 0
    %v2007 = vsel %vm238, %v1976, 0
    %v2010 = vsel %vm238, %v1977, 0
    %v2013 = vsel %vm238, %v1978, 0
    %2015 = vmatprep.subr.mxu0 0.0
    %2016 = vmatpush1.msra.mxu0 %v60
    %2017 = vmatprep.subr.mxu0 0.0
    %2018 = vmatpush1.msra.mxu0 %v61
    %2019 = vmatprep.subr.mxu0 0.0
    %2020 = vmatpush1.msra.mxu0 0.0
    %2021 = vmatprep.subr.mxu0 0.0
    %2022 = vmatpush1.msra.mxu0 0.0
    %2023 = vmatprep.subr.mxu0 0.0
    %2024 = vmatpush1.msra.mxu0 0.0
    %2025 = vmatprep.subr.mxu0 0.0
    %2026 = vmatpush1.msra.mxu0 0.0
    %2027 = vmatprep.subr.mxu0 0.0
    %2028 = vmatpush1.msra.mxu0 0.0
    %2029 = vmatprep.subr.mxu0 0.0
    %2030 = vmatpush1.msra.mxu0 0.0
    %2031 = vmatprep.subr.mxu0 0.0
    %2032 = vmatpush1.msra.mxu0 0.0
    %2033 = vmatprep.subr.mxu0 0.0
    %2034 = vmatpush1.msra.mxu0 0.0
    %2035 = vmatprep.subr.mxu0 0.0
    %2036 = vmatpush1.msra.mxu0 0.0
    %2037 = vmatprep.subr.mxu0 0.0
    %2038 = vmatpush1.msra.mxu0 0.0
    %2039 = vmatprep.subr.mxu0 0.0
    %2040 = vmatpush1.msra.mxu0 0.0
    %2041 = vmatprep.subr.mxu0 0.0
    %2042 = vmatpush1.msra.mxu0 0.0
    %2043 = vmatprep.subr.mxu0 0.0
    %2044 = vmatpush1.msra.mxu0 0.0
    %2045 = vmatprep.subr.mxu0 0.0
    %2046 = vmatpush1.msra.mxu0 0.0
    %2047 = vmatprep.subr.mxu0 0.0
    %2048 = vmatpush1.msra.mxu0 0.0
    %2049 = vmatprep.subr.mxu0 0.0
    %2050 = vmatpush1.msra.mxu0 0.0
    %2051 = vmatprep.subr.mxu0 0.0
    %2052 = vmatpush1.msra.mxu0 0.0
    %2053 = vmatprep.subr.mxu0 0.0
    %2054 = vmatpush1.msra.mxu0 0.0
    %2055 = vmatprep.subr.mxu0 0.0
    %2056 = vmatpush1.msra.mxu0 0.0
    %2057 = vmatprep.subr.mxu0 0.0
    %2058 = vmatpush1.msra.mxu0 0.0
    %2059 = vmatprep.subr.mxu0 0.0
    %2060 = vmatpush1.msra.mxu0 0.0
    %2061 = vmatprep.subr.mxu0 0.0
    %2062 = vmatpush1.msra.mxu0 0.0
    %2063 = vmatprep.subr.mxu0 0.0
    %2064 = vmatpush1.msra.mxu0 0.0
    %2065 = vmatprep.subr.mxu0 0.0
    %2066 = vmatpush1.msra.mxu0 0.0
    %2067 = vmatprep.subr.mxu0 0.0
    %2068 = vmatpush1.msra.mxu0 0.0
    %2069 = vmatprep.subr.mxu0 0.0
    %2070 = vmatpush1.msra.mxu0 0.0
    %2071 = vmatprep.subr.mxu0 0.0
    %2072 = vmatpush1.msra.mxu0 0.0
    %2073 = vmatprep.subr.mxu0 0.0
    %2074 = vmatpush1.msra.mxu0 0.0
    %2075 = vmatprep.subr.mxu0 0.0
    %2076 = vmatpush1.msra.mxu0 0.0
    %2077 = vmatprep.subr.mxu0 0.0
    %2078 = vmatpush1.msra.mxu0 0.0
    %2079 = vmatprep.mubr.f32.mxu0 0.0
    %2080 = vmatmul.mubr.f32.gmra.mrb[0].mxu0 %v2004
    %v2081 = vpop.f32.mrb[0].mxu0
    %v2082 = vadd.f32 %v1986, %v2081
    %v2083 = vpop.f32.mrb[0].mxu0
    %2084 = vmatprep.mubr.f32.mxu0 0.0
    %2085 = vmatmul.mubr.f32.gmra.mrb[0].mxu0 %v2007
    %v2086 = vpop.f32.mrb[0].mxu0
    %v2087 = vadd.f32 %v1991, %v2086
    %v2088 = vpop.f32.mrb[0].mxu0
    %2089 = vmatprep.mubr.f32.mxu0 0.0
    %2090 = vmatmul.mubr.f32.gmra.mrb[0].mxu0 %v2010
    %v2091 = vpop.f32.mrb[0].mxu0
    %v2092 = vadd.f32 %v1996, %v2091
    %v2093 = vpop.f32.mrb[0].mxu0
    %2094 = vmatprep.mubr.f32.mxu0 0.0
    %2095 = vmatmul.mubr.f32.gmra.mrb[0].mxu0 %v2013
    %v2096 = vpop.f32.mrb[0].mxu0
    %v2097 = vadd.f32 %v2001, %v2096
    %v2098 = vpop.f32.mrb[0].mxu0
    %2099 = vdwg.mxu0
    %v2100 = vadd.f32 %v2082, %v1957
    %v2101 = vadd.f32 %v2087, %v1962
    %v2102 = vadd.f32 %v2092, %v1967
    %v2103 = vadd.f32 %v2097, %v1972
    %2104 = vst [vmem:[#allocation2] sm:$0xff] %v2100
    %2105 = vst [vmem:[#allocation2 + $0x8] sm:$0xff] %v2101
    %2106 = vst [vmem:[#allocation2 + $0x10] sm:$0xff] %v2102
    %2107 = vst [vmem:[#allocation2 + $0x18] sm:$0xff] %v2103
    // Predicated region
    $region74: #{tpu_custom_call.1} parent=1 // pred_check
      _
    $region75: #{tpu_custom_call.1} parent=1 // pred_check_branch
      %2109 = sbr.rel (0) target = $region77
    $region76: #{tpu_custom_call.1} parent=1 // pred_region
      %s2111 = ssub.s32 512, 512
      %2112 = vsyncadd [#allocation3], %s2111
      %s2113 = sshll.u32 [#allocation2], 4
      %s2114 = int_to_ptr.vmem [resolvable:$true] %s2113
      %2119 = dma.vmem_to_hbm [thread:$0]  %s2114, 512, %s18, [#allocation3], 128, 128, 8
    $region77: #{tpu_custom_call.1} parent=1 // pred_fallthru
      _
    // Predicated region
    $region78: #{tpu_custom_call.1} parent=1 // pred_check
      _
    $region79: #{tpu_custom_call.1} parent=1 // pred_check_branch
      %2121 = sbr.rel (0) target = $region81
    $region80: #{tpu_custom_call.1} parent=1 // pred_region
      %2122 = dma.done [#allocation3], 512
    $region81: #{tpu_custom_call.1} parent=1 // pred_fallthru
      _
    %2123 = vsyncpa [#allocation3], 1

</llo_original>
